<compile_context>
chip_gen: v5e
topology: v5e:2x2
jax: 0.10.0
libtpu: 0.0.40
codegen_flags: <defaults>
</compile_context>

<pallas_src>
import functools
import math

import jax
import jax.numpy as jnp
from jax.experimental import pallas as pl
from jax.experimental.pallas import tpu as pltpu


# Tile targets (production-shape oriented; they collapse to full dims at the
# toy shapes in __main__).
_TM, _TN, _TK, _TF = 512, 512, 512, 512


def _fit(dim, target, quantum):
    """Largest tile <= target that divides dim and is a multiple of quantum
    (8 for sublane dims, 128 for lane dims).  Falls back to the full dim
    (single tile) only when no aligned divisor exists."""
    if dim <= target:
        return dim
    t = (target // quantum) * quantum
    while t >= quantum:
        if dim % t == 0:
            return t
        t -= quantum
    return dim


def _compiler_params(dims):
    """dimension_semantics + a per-generation VMEM limit when detectable."""
    try:
        cap = pltpu.get_tpu_info().vmem_capacity_bytes
        limit = min(int(cap * 3 // 4), 96 << 20)
    except Exception:  # noqa: BLE001 - hardware query is best-effort
        limit = None
    return pltpu.CompilerParams(dimension_semantics=dims, vmem_limit_bytes=limit)


# ---------------------------------------------------------------------------
# Pallas kernels
# ---------------------------------------------------------------------------
def _matmul_bias_kernel(x_ref, w_ref, b_ref, o_ref, acc_ref):
    k = pl.program_id(2)

    @pl.when(k == 0)
    def _():
        acc_ref[...] = jnp.zeros_like(acc_ref)

    acc_ref[...] += jnp.dot(x_ref[...], w_ref[...],
                            preferred_element_type=jnp.float32)

    @pl.when(k == pl.num_programs(2) - 1)
    def _():
        o_ref[...] = (acc_ref[...] + b_ref[...].astype(jnp.float32)
                      ).astype(o_ref.dtype)


def linear_pallas(x, w, b):
    """y = x @ w + b.  x:(M,K) bf16, w:(K,N) bf16, b:(N,) f32 -> (M,N) bf16."""
    M, K = x.shape
    _, N = w.shape
    tm, tn, tk = _fit(M, _TM, 8), _fit(N, _TN, 128), _fit(K, _TK, 128)
    grid = (M // tm, N // tn, K // tk)
    return pl.pallas_call(
        _matmul_bias_kernel,
        out_shape=jax.ShapeDtypeStruct((M, N), x.dtype),
        grid=grid,
        in_specs=[
            pl.BlockSpec((tm, tk), lambda i, j, k: (i, k)),
            pl.BlockSpec((tk, tn), lambda i, j, k: (k, j)),
            pl.BlockSpec((1, tn), lambda i, j, k: (0, j)),
        ],
        out_specs=pl.BlockSpec((tm, tn), lambda i, j, k: (i, j)),
        scratch_shapes=[pltpu.VMEM((tm, tn), jnp.float32)],
        compiler_params=_compiler_params(("parallel", "parallel", "arbitrary")),
    )(x, w, b.reshape(1, N))


def _matmul_resid_ln_kernel(x_ref, w_ref, b_ref, r_ref, g_ref, bt_ref,
                            o_ref, acc_ref, *, eps):
    k = pl.program_id(1)

    @pl.when(k == 0)
    def _():
        acc_ref[...] = jnp.zeros_like(acc_ref)

    acc_ref[...] += jnp.dot(x_ref[...], w_ref[...],
                            preferred_element_type=jnp.float32)

    @pl.when(k == pl.num_programs(1) - 1)
    def _():
        y = (acc_ref[...] + b_ref[...].astype(jnp.float32)
             + r_ref[...].astype(jnp.float32))
        mu = jnp.mean(y, axis=-1, keepdims=True)
        var = jnp.mean((y - mu) ** 2, axis=-1, keepdims=True)
        yn = (y - mu) * jax.lax.rsqrt(var + eps)
        o_ref[...] = (yn * g_ref[...].astype(jnp.float32)
                      + bt_ref[...].astype(jnp.float32)).astype(o_ref.dtype)


def linear_residual_ln_pallas(x, w, b, resid, gamma, beta, eps=1e-12):
    """LayerNorm(resid + x @ w + b) fused in the matmul epilogue (full-N tiles)."""
    M, K = x.shape
    _, N = w.shape
    tm, tk = _fit(M, _TM, 8), _fit(K, _TK, 128)
    grid = (M // tm, K // tk)
    kern = functools.partial(_matmul_resid_ln_kernel, eps=eps)
    return pl.pallas_call(
        kern,
        out_shape=jax.ShapeDtypeStruct((M, N), x.dtype),
        grid=grid,
        in_specs=[
            pl.BlockSpec((tm, tk), lambda i, k: (i, k)),
            pl.BlockSpec((tk, N), lambda i, k: (k, 0)),
            pl.BlockSpec((1, N), lambda i, k: (0, 0)),
            pl.BlockSpec((tm, N), lambda i, k: (i, 0)),
            pl.BlockSpec((1, N), lambda i, k: (0, 0)),
            pl.BlockSpec((1, N), lambda i, k: (0, 0)),
        ],
        out_specs=pl.BlockSpec((tm, N), lambda i, k: (i, 0)),
        scratch_shapes=[pltpu.VMEM((tm, N), jnp.float32)],
        compiler_params=_compiler_params(("parallel", "arbitrary")),
    )(x, w, b.reshape(1, N), resid, gamma.reshape(1, N), beta.reshape(1, N))


def _ffn_ln_kernel(x_ref, w1_ref, b1_ref, w2_ref, b2_ref, r_ref, g_ref,
                   bt_ref, o_ref, acc_ref, *, eps):
    # F-tiled FFN: gelu(x @ W1[:, f] + b1[f]) @ W2[f, :] accumulated in f32,
    # residual + LayerNorm epilogue at the last F tile.  The (tm, tf)
    # intermediate and the weight tiles never exceed one tile's footprint.
    f = pl.program_id(1)

    @pl.when(f == 0)
    def _():
        acc_ref[...] = jnp.zeros_like(acc_ref)

    h = (jnp.dot(x_ref[...], w1_ref[...], preferred_element_type=jnp.float32)
         + b1_ref[...].astype(jnp.float32))
    h = jax.nn.gelu(h)
    acc_ref[...] += jnp.dot(h.astype(x_ref.dtype), w2_ref[...],
                            preferred_element_type=jnp.float32)

    @pl.when(f == pl.num_programs(1) - 1)
    def _():
        y = (acc_ref[...] + b2_ref[...].astype(jnp.float32)
             + r_ref[...].astype(jnp.float32))
        mu = jnp.mean(y, axis=-1, keepdims=True)
        var = jnp.mean((y - mu) ** 2, axis=-1, keepdims=True)
        yn = (y - mu) * jax.lax.rsqrt(var + eps)
        o_ref[...] = (yn * g_ref[...].astype(jnp.float32)
                      + bt_ref[...].astype(jnp.float32)).astype(o_ref.dtype)


def ffn_ln_pallas(x, w1, b1, w2, b2, resid, gamma, beta, eps=1e-12):
    """Fused FFN block, tiled over the intermediate dim F (bounded VMEM)."""
    M, H = x.shape
    _, F = w1.shape
    tm = _fit(M, _TM, 8)
    tf = _fit(F, _TF, 128)
    grid = (M // tm, F // tf)
    kern = functools.partial(_ffn_ln_kernel, eps=eps)
    return pl.pallas_call(
        kern,
        out_shape=jax.ShapeDtypeStruct((M, H), x.dtype),
        grid=grid,
        in_specs=[
            pl.BlockSpec((tm, H), lambda i, f: (i, 0)),
            pl.BlockSpec((H, tf), lambda i, f: (0, f)),
            pl.BlockSpec((1, tf), lambda i, f: (0, f)),
            pl.BlockSpec((tf, H), lambda i, f: (f, 0)),
            pl.BlockSpec((1, H), lambda i, f: (0, 0)),
            pl.BlockSpec((tm, H), lambda i, f: (i, 0)),
            pl.BlockSpec((1, H), lambda i, f: (0, 0)),
            pl.BlockSpec((1, H), lambda i, f: (0, 0)),
        ],
        out_specs=pl.BlockSpec((tm, H), lambda i, f: (i, 0)),
        scratch_shapes=[pltpu.VMEM((tm, H), jnp.float32)],
        compiler_params=_compiler_params(("parallel", "arbitrary")),
    )(x, w1, b1.reshape(1, F), w2, b2.reshape(1, H), resid,
      gamma.reshape(1, H), beta.reshape(1, H))


def _attn_kernel(q_ref, k_ref, v_ref, bias_ref, o_ref, *, scale, nh, hd):
    # One (batch, query-tile) step: all heads processed here; scores, mask,
    # softmax and context stay in VMEM; the only store is one lane-dense
    # (tq, H) tile (no per-head hd-wide masked stores, no transposes).
    q_all = q_ref[...]                              # (tq, H) bf16
    k_all = k_ref[...]                              # (S,  H) bf16
    v_all = v_ref[...]                              # (S,  H) bf16
    bias = bias_ref[...].astype(jnp.float32)        # (1, S) additive mask
    outs = []
    for h in range(nh):                             # static, small head count
        sl = slice(h * hd, (h + 1) * hd)
        q = q_all[:, sl]
        k = k_all[:, sl]
        v = v_all[:, sl]
        s = jax.lax.dot_general(q, k, (((1,), (1,)), ((), ())),
                                preferred_element_type=jnp.float32) * scale
        s = s + bias
        s = s - jnp.max(s, axis=-1, keepdims=True)
        p = jnp.exp(s)
        p = p / jnp.sum(p, axis=-1, keepdims=True)  # exact divide (torch parity)
        ctx = jnp.dot(p.astype(v.dtype), v, preferred_element_type=jnp.float32)
        outs.append(ctx.astype(o_ref.dtype))
    o_ref[...] = jnp.concatenate(outs, axis=-1)
    # TODO(synk): for S >= 256 switch to a key-block online-softmax (flash)
    # variant so the (tq, S) score tile stays bounded.


def attention_pallas(qkv, attn_bias, batch, seq, num_heads):
    """qkv:(B*S, 3H) bf16 (fused Q|K|V projection), attn_bias:(B,1,S) f32
    -> context:(B*S, H) bf16.  Q/K/V are selected via column block indices of
    the same array (passed three times); the output layout matches the next
    matmul's input so no transposes are needed."""
    M, threeH = qkv.shape
    H = threeH // 3
    hd = H // num_heads
    tq = _fit(seq, 256, 8)
    qblocks = seq // tq
    kern = functools.partial(_attn_kernel, scale=1.0 / math.sqrt(hd),
                             nh=num_heads, hd=hd)
    return pl.pallas_call(
        kern,
        out_shape=jax.ShapeDtypeStruct((M, H), qkv.dtype),
        grid=(batch, qblocks),
        in_specs=[
            pl.BlockSpec((tq, H), lambda b, qi: (b * qblocks + qi, 0)),   # Q rows
            pl.BlockSpec((seq, H), lambda b, qi: (b, 1)),                 # K (all keys of b)
            pl.BlockSpec((seq, H), lambda b, qi: (b, 2)),                 # V
            pl.BlockSpec((None, 1, seq), lambda b, qi: (b, 0, 0)),        # additive mask bias
        ],
        out_specs=pl.BlockSpec((tq, H), lambda b, qi: (b * qblocks + qi, 0)),
        compiler_params=_compiler_params(("parallel", "parallel")),
    )(qkv, qkv, qkv, attn_bias)


def _head_kernel(p_ref, w1_ref, b1_ref, w2_ref, b2_ref, o_ref):
    # pre_classifier -> ReLU -> (dropout, identity at inference) -> classifier
    h = (jnp.dot(p_ref[...], w1_ref[...], preferred_element_type=jnp.float32)
         + b1_ref[...])
    h = jnp.maximum(h, 0.0)
    # TODO(synk): nn.Dropout(0.5) is a stochastic train-time op; identity at inference.
    o_ref[...] = (jnp.dot(h.astype(w2_ref.dtype), w2_ref[...],
                          preferred_element_type=jnp.float32) + b2_ref[...])


def classifier_head_pallas(pooled, w1, b1, w2_p, b2_p, num_classes):
    """pooled:(B,H) bf16 -> logits:(B,C) f32.  Class dim was padded to 128
    lanes at init time; only the batch rows are padded (to 8) per call."""
    B, H = pooled.shape
    Cp = w2_p.shape[1]
    Bp = ((B + 7) // 8) * 8
    pooled_p = jnp.pad(pooled, ((0, Bp - B), (0, 0)))
    vmem = pl.BlockSpec(memory_space=pltpu.MemorySpace.VMEM)
    out = pl.pallas_call(
        _head_kernel,
        out_shape=jax.ShapeDtypeStruct((Bp, Cp), jnp.float32),
        in_specs=[vmem] * 5,
        out_specs=vmem,
    )(pooled_p, w1, b1.reshape(1, H), w2_p, b2_p.reshape(1, Cp))
    return out[:B, :num_classes]


# ---------------------------------------------------------------------------
# Synthetic mini-BERT backbone built from the kernels above
# ---------------------------------------------------------------------------
def layer_norm_f32(x, g, b, eps=1e-12):
    x = x.astype(jnp.float32)
    mu = jnp.mean(x, axis=-1, keepdims=True)
    var = jnp.mean((x - mu) ** 2, axis=-1, keepdims=True)
    return (x - mu) * jax.lax.rsqrt(var + eps) * g + b


def encoder_layer(h2d, attn_bias, p, batch, seq, num_heads):
    """h2d: (B*S, H) bf16 activations, kept 2-D across the whole layer."""
    # Fused Q|K|V projection: one matmul, one HBM read of the activations.
    qkv = linear_pallas(h2d, p["w_qkv"], p["b_qkv"])                 # (B*S, 3H)
    # Attention consumes the fused projection directly; no transposes.
    ctx = attention_pallas(qkv, attn_bias, batch, seq, num_heads)    # (B*S, H)
    # Output projection + bias + residual + LayerNorm fused.
    h1 = linear_residual_ln_pallas(ctx, p["wo"], p["bo"], h2d,
                                   p["ln1_g"], p["ln1_b"])
    # FFN (F-tiled) + GELU + bias + residual + LayerNorm fused.
    h2 = ffn_ln_pallas(h1, p["w_ff1"], p["b_ff1"], p["w_ff2"], p["b_ff2"],
                       h1, p["ln2_g"], p["ln2_b"])
    return h2


@functools.partial(jax.jit, static_argnames=("num_heads", "num_classes"))
def model_classifier_forward(params, input_id, mask, num_heads, num_classes):
    """Mirrors ModelClassifier.forward: backbone -> hidden_state[:,0] -> head."""
    B, S = input_id.shape

    # Embeddings (word + position) + LayerNorm (stats in f32), bf16 activations.
    h = params["word_emb"][input_id] + params["pos_emb"][:S][None, :, :]
    h = layer_norm_f32(h, params["emb_ln_g"], params["emb_ln_b"]).astype(jnp.bfloat16)
    h2d = h.reshape(B * S, -1)

    # Additive key-padding bias: computed ONCE, reused by every layer / head.
    attn_bias = (1.0 - mask.astype(jnp.float32)).reshape(B, 1, S) * jnp.float32(-1e9)

    for lp in params["layers"]:
        h2d = encoder_layer(h2d, attn_bias, lp, B, S, num_heads)

    pooler = h2d.reshape(B, S, -1)[:, 0]  # hidden_state[:, 0] — CLS token
    logits = classifier_head_pallas(
        pooler, params["pre_w"], params["pre_b"], params["cls_w"],
        params["cls_b"], num_classes)
    return logits


# ---------------------------------------------------------------------------
# Deterministic parameter construction (bf16 weights, f32 biases / LN params)
# ---------------------------------------------------------------------------
def init_params(key, vocab, max_pos, H, num_heads, ffn, num_layers, num_classes):
    def nrm(k, shape, scale=0.02):
        return (scale * jax.random.normal(k, shape, dtype=jnp.float32)
                ).astype(jnp.bfloat16)

    keys = iter(jax.random.split(key, 200))
    Cp = ((num_classes + 127) // 128) * 128  # lane-pad classes at init time
    params = {
        "word_emb": nrm(next(keys), (vocab, H)),
        "pos_emb": nrm(next(keys), (max_pos, H)),
        "emb_ln_g": jnp.ones((H,), jnp.float32),
        "emb_ln_b": jnp.zeros((H,), jnp.float32),
        "layers": [],
        "pre_w": nrm(next(keys), (H, H)),
        "pre_b": jnp.zeros((H,), jnp.float32),
        "cls_w": jnp.pad(nrm(next(keys), (H, num_classes)),
                         ((0, 0), (0, Cp - num_classes))),
        "cls_b": jnp.zeros((Cp,), jnp.float32),
    }
    for _ in range(num_layers):
        lp = {
            # Q|K|V fused along the output axis: (H, 3H), cols = [Q | K | V].
            "w_qkv": nrm(next(keys), (H, 3 * H)),
            "b_qkv": jnp.zeros((3 * H,), jnp.float32),
            "wo": nrm(next(keys), (H, H)), "bo": jnp.zeros((H,), jnp.float32),
            "ln1_g": jnp.ones((H,), jnp.float32), "ln1_b": jnp.zeros((H,), jnp.float32),
            "w_ff1": nrm(next(keys), (H, ffn)), "b_ff1": jnp.zeros((ffn,), jnp.float32),
            "w_ff2": nrm(next(keys), (ffn, H)), "b_ff2": jnp.zeros((H,), jnp.float32),
            "ln2_g": jnp.ones((H,), jnp.float32), "ln2_b": jnp.zeros((H,), jnp.float32),
        }
        params["layers"].append(lp)
    return params


if __name__ == "__main__":
    # Small, lane-aligned toy config (H multiple of 128 keeps every column
    # block of the fused Q|K|V array lane-dense).
    B, S = 2, 8
    H, num_heads, ffn, layers = 128, 2, 512, 2
    vocab, max_pos, num_classes = 100, 64, 3

    key = jax.random.PRNGKey(0)
    k_params, k_ids = jax.random.split(key)
    params = init_params(k_params, vocab, max_pos, H, num_heads, ffn, layers,
                         num_classes)

    input_id = jax.random.randint(k_ids, (B, S), 0, vocab, dtype=jnp.int32)
    mask = jnp.ones((B, S), dtype=jnp.int32)
    mask = mask.at[1, 6:].set(0)  # pad out tail of second example

    logits = model_classifier_forward(params, input_id, mask,
                                      num_heads=num_heads,
                                      num_classes=num_classes)
    jax.block_until_ready(logits)
    assert logits.shape == (B, num_classes) and logits.dtype == jnp.float32
    assert bool(jnp.all(jnp.isfinite(logits)))
    print("KERNEL_OK")
</pallas_src>

<mosaic_0001>
module attributes {stable_mosaic.version = 11 : i64} {
  func.func @_matmul_bias_kernel(%arg0: i32, %arg1: i32, %arg2: i32, %arg3: memref<16x128xbf16, #tpu.memory_space<vmem>>, %arg4: memref<128x384xbf16, #tpu.memory_space<vmem>>, %arg5: memref<1x384xf32, #tpu.memory_space<vmem>>, %arg6: memref<16x384xbf16, #tpu.memory_space<vmem>>, %arg7: memref<16x384xf32, #tpu.memory_space<vmem>>) attributes {dimension_semantics = [#tpu.dimension_semantics<parallel>, #tpu.dimension_semantics<parallel>, #tpu.dimension_semantics<arbitrary>], iteration_bounds = array<i64: 1, 1, 1>, scalar_prefetch = 0 : i64, scratch_operands = 1 : i64, tpu.core_type = #tpu.core_type<tc>, window_params = [{transform_indices = @transform_0, window_bounds = array<i64: 16, 128>}, {transform_indices = @transform_1, window_bounds = array<i64: 128, 384>}, {transform_indices = @transform_2, window_bounds = array<i64: 1, 384>}, {transform_indices = @transform_3, window_bounds = array<i64: 16, 384>}]} {
    %c0_i32 = arith.constant 0 : i32
    %0 = arith.cmpi eq, %arg2, %c0_i32 : i32
    %1 = arith.extui %0 : i1 to i32
    %c0_i32_0 = arith.constant 0 : i32
    %2 = arith.cmpi ne, %1, %c0_i32_0 : i32
    scf.if %2 {
      %cst_10 = arith.constant 0.000000e+00 : f32
      %12 = vector.broadcast %cst_10 : f32 to vector<16x384xf32>
      %c0_11 = arith.constant 0 : index
      %c0_12 = arith.constant 0 : index
      %13 = vector.load %arg7[%c0_11, %c0_12] : memref<16x384xf32, #tpu.memory_space<vmem>>, vector<16x384xf32>
      tpu.vector_store %arg7[%c0_11, %c0_12], %12 {strides = array<i32>} : memref<16x384xf32, #tpu.memory_space<vmem>>, vector<16x384xf32>,
    } else {
    }
    %c0 = arith.constant 0 : index
    %c0_1 = arith.constant 0 : index
    %3 = vector.load %arg7[%c0, %c0_1] : memref<16x384xf32, #tpu.memory_space<vmem>>, vector<16x384xf32>
    %c0_2 = arith.constant 0 : index
    %c0_3 = arith.constant 0 : index
    %4 = vector.load %arg3[%c0_2, %c0_3] : memref<16x128xbf16, #tpu.memory_space<vmem>>, vector<16x128xbf16>
    %c0_4 = arith.constant 0 : index
    %c0_5 = arith.constant 0 : index
    %5 = vector.load %arg4[%c0_4, %c0_5] : memref<128x384xbf16, #tpu.memory_space<vmem>>, vector<128x384xbf16>
    %cst = arith.constant dense<0.000000e+00> : vector<16x384xf32>
    %6 = tpu.matmul %4, %5, %cst {dimension_numbers = #tpu.dot_dimension_numbers<[1], [0], [0], [1], [0, 0, 1, 1], [], []>} : vector<16x128xbf16>, vector<128x384xbf16>, vector<16x384xf32> -> vector<16x384xf32>
    %7 = arith.addf %3, %6 : vector<16x384xf32>
    %c0_6 = arith.constant 0 : index
    %c0_7 = arith.constant 0 : index
    %8 = vector.load %arg7[%c0_6, %c0_7] : memref<16x384xf32, #tpu.memory_space<vmem>>, vector<16x384xf32>
    tpu.vector_store %arg7[%c0_6, %c0_7], %7 {strides = array<i32>} : memref<16x384xf32, #tpu.memory_space<vmem>>, vector<16x384xf32>,
    %c0_i32_8 = arith.constant 0 : i32
    %9 = arith.cmpi eq, %arg2, %c0_i32_8 : i32
    %10 = arith.extui %9 : i1 to i32
    %c0_i32_9 = arith.constant 0 : i32
    %11 = arith.cmpi ne, %10, %c0_i32_9 : i32
    scf.if %11 {
      %c0_10 = arith.constant 0 : index
      %c0_11 = arith.constant 0 : index
      %12 = vector.load %arg7[%c0_10, %c0_11] : memref<16x384xf32, #tpu.memory_space<vmem>>, vector<16x384xf32>
      %c0_12 = arith.constant 0 : index
      %c0_13 = arith.constant 0 : index
      %13 = vector.load %arg5[%c0_12, %c0_13] : memref<1x384xf32, #tpu.memory_space<vmem>>, vector<1x384xf32>
      %14 = vector.broadcast %13 : vector<1x384xf32> to vector<16x384xf32>
      %15 = arith.addf %12, %14 : vector<16x384xf32>
      %16 = arith.truncf %15 : vector<16x384xf32> to vector<16x384xbf16>
      %c0_14 = arith.constant 0 : index
      %c0_15 = arith.constant 0 : index
      %17 = vector.load %arg6[%c0_14, %c0_15] : memref<16x384xbf16, #tpu.memory_space<vmem>>, vector<16x384xbf16>
      tpu.vector_store %arg6[%c0_14, %c0_15], %16 {strides = array<i32>} : memref<16x384xbf16, #tpu.memory_space<vmem>>, vector<16x384xbf16>,
    } else {
    }
    return
  }
  func.func @transform_0(%arg0: i32, %arg1: i32, %arg2: i32) -> (i32, i32) {
    %c0_i32 = arith.constant 0 : i32
    return %arg0, %arg2 : i32, i32
  }
  func.func @transform_1(%arg0: i32, %arg1: i32, %arg2: i32) -> (i32, i32) {
    %c0_i32 = arith.constant 0 : i32
    return %arg2, %arg1 : i32, i32
  }
  func.func @transform_2(%arg0: i32, %arg1: i32, %arg2: i32) -> (i32, i32) {
    %c0_i32 = arith.constant 0 : i32
    %c0_i32_0 = arith.constant 0 : i32
    return %c0_i32, %arg1 : i32, i32
  }
  func.func @transform_3(%arg0: i32, %arg1: i32, %arg2: i32) -> (i32, i32) {
    %c0_i32 = arith.constant 0 : i32
    return %arg0, %arg1 : i32, i32
  }
}

module attributes {stable_mosaic.version = 11 : i64} {
  func.func @_matmul_resid_ln_kernel(%arg0: i32, %arg1: i32, %arg2: memref<16x128xbf16, #tpu.memory_space<vmem>>, %arg3: memref<128x128xbf16, #tpu.memory_space<vmem>>, %arg4: memref<1x128xf32, #tpu.memory_space<vmem>>, %arg5: memref<16x128xbf16, #tpu.memory_space<vmem>>, %arg6: memref<1x128xf32, #tpu.memory_space<vmem>>, %arg7: memref<1x128xf32, #tpu.memory_space<vmem>>, %arg8: memref<16x128xbf16, #tpu.memory_space<vmem>>, %arg9: memref<16x128xf32, #tpu.memory_space<vmem>>) attributes {dimension_semantics = [#tpu.dimension_semantics<parallel>, #tpu.dimension_semantics<arbitrary>], iteration_bounds = array<i64: 1, 1>, scalar_prefetch = 0 : i64, scratch_operands = 1 : i64, tpu.core_type = #tpu.core_type<tc>, window_params = [{transform_indices = @transform_0, window_bounds = array<i64: 16, 128>}, {transform_indices = @transform_1, window_bounds = array<i64: 128, 128>}, {pipeline_mode = #tpu.pipeline_mode<synchronous>, transform_indices = @transform_2, window_bounds = array<i64: 1, 128>}, {transform_indices = @transform_3, window_bounds = array<i64: 16, 128>}, {pipeline_mode = #tpu.pipeline_mode<synchronous>, transform_indices = @transform_4, window_bounds = array<i64: 1, 128>}, {pipeline_mode = #tpu.pipeline_mode<synchronous>, transform_indices = @transform_5, window_bounds = array<i64: 1, 128>}, {transform_indices = @transform_6, window_bounds = array<i64: 16, 128>}]} {
    %c0_i32 = arith.constant 0 : i32
    %0 = arith.cmpi eq, %arg1, %c0_i32 : i32
    %1 = arith.extui %0 : i1 to i32
    %c0_i32_0 = arith.constant 0 : i32
    %2 = arith.cmpi ne, %1, %c0_i32_0 : i32
    scf.if %2 {
      %cst_10 = arith.constant 0.000000e+00 : f32
      %12 = vector.broadcast %cst_10 : f32 to vector<16x128xf32>
      %c0_11 = arith.constant 0 : index
      %c0_12 = arith.constant 0 : index
      %13 = vector.load %arg9[%c0_11, %c0_12] : memref<16x128xf32, #tpu.memory_space<vmem>>, vector<16x128xf32>
      tpu.vector_store %arg9[%c0_11, %c0_12], %12 {strides = array<i32>} : memref<16x128xf32, #tpu.memory_space<vmem>>, vector<16x128xf32>,
    } else {
    }
    %c0 = arith.constant 0 : index
    %c0_1 = arith.constant 0 : index
    %3 = vector.load %arg9[%c0, %c0_1] : memref<16x128xf32, #tpu.memory_space<vmem>>, vector<16x128xf32>
    %c0_2 = arith.constant 0 : index
    %c0_3 = arith.constant 0 : index
    %4 = vector.load %arg2[%c0_2, %c0_3] : memref<16x128xbf16, #tpu.memory_space<vmem>>, vector<16x128xbf16>
    %c0_4 = arith.constant 0 : index
    %c0_5 = arith.constant 0 : index
    %5 = vector.load %arg3[%c0_4, %c0_5] : memref<128x128xbf16, #tpu.memory_space<vmem>>, vector<128x128xbf16>
    %cst = arith.constant dense<0.000000e+00> : vector<16x128xf32>
    %6 = tpu.matmul %4, %5, %cst {dimension_numbers = #tpu.dot_dimension_numbers<[1], [0], [0], [1], [0, 0, 1, 1], [], []>} : vector<16x128xbf16>, vector<128x128xbf16>, vector<16x128xf32> -> vector<16x128xf32>
    %7 = arith.addf %3, %6 : vector<16x128xf32>
    %c0_6 = arith.constant 0 : index
    %c0_7 = arith.constant 0 : index
    %8 = vector.load %arg9[%c0_6, %c0_7] : memref<16x128xf32, #tpu.memory_space<vmem>>, vector<16x128xf32>
    tpu.vector_store %arg9[%c0_6, %c0_7], %7 {strides = array<i32>} : memref<16x128xf32, #tpu.memory_space<vmem>>, vector<16x128xf32>,
    %c0_i32_8 = arith.constant 0 : i32
    %9 = arith.cmpi eq, %arg1, %c0_i32_8 : i32
    %10 = arith.extui %9 : i1 to i32
    %c0_i32_9 = arith.constant 0 : i32
    %11 = arith.cmpi ne, %10, %c0_i32_9 : i32
    scf.if %11 {
      %c0_10 = arith.constant 0 : index
      %c0_11 = arith.constant 0 : index
      %12 = vector.load %arg9[%c0_10, %c0_11] : memref<16x128xf32, #tpu.memory_space<vmem>>, vector<16x128xf32>
      %c0_12 = arith.constant 0 : index
      %c0_13 = arith.constant 0 : index
      %13 = vector.load %arg4[%c0_12, %c0_13] : memref<1x128xf32, #tpu.memory_space<vmem>>, vector<1x128xf32>
      %14 = vector.broadcast %13 : vector<1x128xf32> to vector<16x128xf32>
      %15 = arith.addf %12, %14 : vector<16x128xf32>
      %c0_14 = arith.constant 0 : index
      %c0_15 = arith.constant 0 : index
      %16 = vector.load %arg5[%c0_14, %c0_15] : memref<16x128xbf16, #tpu.memory_space<vmem>>, vector<16x128xbf16>
      %17 = arith.extf %16 : vector<16x128xbf16> to vector<16x128xf32>
      %18 = arith.addf %15, %17 : vector<16x128xf32>
      %cst_16 = arith.constant dense<0.000000e+00> : vector<16xf32>
      %19 = vector.multi_reduction <add>, %18, %cst_16 [1] : vector<16x128xf32> to vector<16xf32>
      %20 = vector.shape_cast %19 : vector<16xf32> to vector<16x1xf32>
      %cst_17 = arith.constant 1.280000e+02 : f32
      %21 = vector.broadcast %cst_17 : f32 to vector<16x1xf32>
      %22 = arith.divf %20, %21 : vector<16x1xf32>
      %23 = vector.broadcast %22 : vector<16x1xf32> to vector<16x128xf32>
      %24 = arith.subf %18, %23 : vector<16x128xf32>
      %25 = arith.mulf %24, %24 : vector<16x128xf32>
      %cst_18 = arith.constant dense<0.000000e+00> : vector<16xf32>
      %26 = vector.multi_reduction <add>, %25, %cst_18 [1] : vector<16x128xf32> to vector<16xf32>
      %27 = vector.shape_cast %26 : vector<16xf32> to vector<16x1xf32>
      %cst_19 = arith.constant 1.280000e+02 : f32
      %28 = vector.broadcast %cst_19 : f32 to vector<16x1xf32>
      %29 = arith.divf %27, %28 : vector<16x1xf32>
      %30 = vector.broadcast %22 : vector<16x1xf32> to vector<16x128xf32>
      %31 = arith.subf %18, %30 : vector<16x128xf32>
      %cst_20 = arith.constant 9.99999996E-13 : f32
      %32 = vector.broadcast %cst_20 : f32 to vector<16x1xf32>
      %33 = arith.addf %29, %32 : vector<16x1xf32>
      %34 = math.rsqrt %33 : vector<16x1xf32>
      %35 = vector.broadcast %34 : vector<16x1xf32> to vector<16x128xf32>
      %36 = arith.mulf %31, %35 : vector<16x128xf32>
      %c0_21 = arith.constant 0 : index
      %c0_22 = arith.constant 0 : index
      %37 = vector.load %arg6[%c0_21, %c0_22] : memref<1x128xf32, #tpu.memory_space<vmem>>, vector<1x128xf32>
      %38 = vector.broadcast %37 : vector<1x128xf32> to vector<16x128xf32>
      %39 = arith.mulf %36, %38 : vector<16x128xf32>
      %c0_23 = arith.constant 0 : index
      %c0_24 = arith.constant 0 : index
      %40 = vector.load %arg7[%c0_23, %c0_24] : memref<1x128xf32, #tpu.memory_space<vmem>>, vector<1x128xf32>
      %41 = vector.broadcast %40 : vector<1x128xf32> to vector<16x128xf32>
      %42 = arith.addf %39, %41 : vector<16x128xf32>
      %43 = arith.truncf %42 : vector<16x128xf32> to vector<16x128xbf16>
      %c0_25 = arith.constant 0 : index
      %c0_26 = arith.constant 0 : index
      %44 = vector.load %arg8[%c0_25, %c0_26] : memref<16x128xbf16, #tpu.memory_space<vmem>>, vector<16x128xbf16>
      tpu.vector_store %arg8[%c0_25, %c0_26], %43 {strides = array<i32>} : memref<16x128xbf16, #tpu.memory_space<vmem>>, vector<16x128xbf16>,
    } else {
    }
    return
  }
  func.func @transform_0(%arg0: i32, %arg1: i32) -> (i32, i32) {
    %c0_i32 = arith.constant 0 : i32
    return %arg0, %arg1 : i32, i32
  }
  func.func @transform_1(%arg0: i32, %arg1: i32) -> (i32, i32) {
    %c0_i32 = arith.constant 0 : i32
    %c0_i32_0 = arith.constant 0 : i32
    return %arg1, %c0_i32 : i32, i32
  }
  func.func @transform_2(%arg0: i32, %arg1: i32) -> (i32, i32) {
    %c0_i32 = arith.constant 0 : i32
    %c0_i32_0 = arith.constant 0 : i32
    %c0_i32_1 = arith.constant 0 : i32
    return %c0_i32, %c0_i32_0 : i32, i32
  }
  func.func @transform_3(%arg0: i32, %arg1: i32) -> (i32, i32) {
    %c0_i32 = arith.constant 0 : i32
    %c0_i32_0 = arith.constant 0 : i32
    return %arg0, %c0_i32 : i32, i32
  }
  func.func @transform_4(%arg0: i32, %arg1: i32) -> (i32, i32) {
    %c0_i32 = arith.constant 0 : i32
    %c0_i32_0 = arith.constant 0 : i32
    %c0_i32_1 = arith.constant 0 : i32
    return %c0_i32, %c0_i32_0 : i32, i32
  }
  func.func @transform_5(%arg0: i32, %arg1: i32) -> (i32, i32) {
    %c0_i32 = arith.constant 0 : i32
    %c0_i32_0 = arith.constant 0 : i32
    %c0_i32_1 = arith.constant 0 : i32
    return %c0_i32, %c0_i32_0 : i32, i32
  }
  func.func @transform_6(%arg0: i32, %arg1: i32) -> (i32, i32) {
    %c0_i32 = arith.constant 0 : i32
    %c0_i32_0 = arith.constant 0 : i32
    return %arg0, %c0_i32 : i32, i32
  }
}

module attributes {stable_mosaic.version = 11 : i64} {
  func.func @_attn_kernel(%arg0: i32, %arg1: i32, %arg2: memref<8x128xbf16, #tpu.memory_space<vmem>>, %arg3: memref<8x128xbf16, #tpu.memory_space<vmem>>, %arg4: memref<8x128xbf16, #tpu.memory_space<vmem>>, %arg5: memref<1x1x8xf32, #tpu.memory_space<vmem>>, %arg6: memref<8x128xbf16, #tpu.memory_space<vmem>>) attributes {dimension_semantics = [#tpu.dimension_semantics<parallel>, #tpu.dimension_semantics<parallel>], iteration_bounds = array<i64: 2, 1>, scalar_prefetch = 0 : i64, scratch_operands = 0 : i64, tpu.core_type = #tpu.core_type<tc>, window_params = [{transform_indices = @transform_0, window_bounds = array<i64: 8, 128>}, {transform_indices = @transform_1, window_bounds = array<i64: 8, 128>}, {transform_indices = @transform_2, window_bounds = array<i64: 8, 128>}, {transform_indices = @transform_3, window_bounds = array<i64: 1, 1, 8>}, {transform_indices = @transform_4, window_bounds = array<i64: 8, 128>}]} {
    %c0 = arith.constant 0 : index
    %c0_0 = arith.constant 0 : index
    %0 = vector.load %arg2[%c0, %c0_0] : memref<8x128xbf16, #tpu.memory_space<vmem>>, vector<8x128xbf16>
    %c0_1 = arith.constant 0 : index
    %c0_2 = arith.constant 0 : index
    %1 = vector.load %arg3[%c0_1, %c0_2] : memref<8x128xbf16, #tpu.memory_space<vmem>>, vector<8x128xbf16>
    %c0_3 = arith.constant 0 : index
    %c0_4 = arith.constant 0 : index
    %2 = vector.load %arg4[%c0_3, %c0_4] : memref<8x128xbf16, #tpu.memory_space<vmem>>, vector<8x128xbf16>
    %c0_5 = arith.constant 0 : index
    %c0_6 = arith.constant 0 : index
    %c0_7 = arith.constant 0 : index
    %3 = vector.load %arg5[%c0_5, %c0_6, %c0_7] : memref<1x1x8xf32, #tpu.memory_space<vmem>>, vector<1x1x8xf32>
    %4 = vector.shape_cast %3 : vector<1x1x8xf32> to vector<1x8xf32>
    %5 = vector.extract_strided_slice %0 {offsets = [0, 0], sizes = [8, 64], strides = [1, 1]} : vector<8x128xbf16> to vector<8x64xbf16>
    %6 = vector.extract_strided_slice %1 {offsets = [0, 0], sizes = [8, 64], strides = [1, 1]} : vector<8x128xbf16> to vector<8x64xbf16>
    %7 = vector.extract_strided_slice %2 {offsets = [0, 0], sizes = [8, 64], strides = [1, 1]} : vector<8x128xbf16> to vector<8x64xbf16>
    %cst = arith.constant dense<0.000000e+00> : vector<8x8xf32>
    %8 = tpu.matmul %5, %6, %cst {dimension_numbers = #tpu.dot_dimension_numbers<[1], [1], [0], [0], [0, 0, 1, 0], [], []>} : vector<8x64xbf16>, vector<8x64xbf16>, vector<8x8xf32> -> vector<8x8xf32>
    %cst_8 = arith.constant 1.250000e-01 : f32
    %9 = vector.broadcast %cst_8 : f32 to vector<8x8xf32>
    %10 = arith.mulf %8, %9 : vector<8x8xf32>
    %11 = vector.broadcast %4 : vector<1x8xf32> to vector<8x8xf32>
    %12 = arith.addf %10, %11 : vector<8x8xf32>
    %cst_9 = arith.constant dense<0xFF800000> : vector<8xf32>
    %13 = vector.multi_reduction <maximumf>, %12, %cst_9 [1] : vector<8x8xf32> to vector<8xf32>
    %14 = vector.shape_cast %13 : vector<8xf32> to vector<8x1xf32>
    %15 = vector.broadcast %14 : vector<8x1xf32> to vector<8x8xf32>
    %16 = arith.subf %12, %15 : vector<8x8xf32>
    %17 = math.exp %16 : vector<8x8xf32>
    %cst_10 = arith.constant dense<0.000000e+00> : vector<8xf32>
    %18 = vector.multi_reduction <add>, %17, %cst_10 [1] : vector<8x8xf32> to vector<8xf32>
    %19 = vector.shape_cast %18 : vector<8xf32> to vector<8x1xf32>
    %20 = vector.broadcast %19 : vector<8x1xf32> to vector<8x8xf32>
    %21 = arith.divf %17, %20 : vector<8x8xf32>
    %22 = arith.truncf %21 : vector<8x8xf32> to vector<8x8xbf16>
    %cst_11 = arith.constant dense<0.000000e+00> : vector<8x64xf32>
    %23 = tpu.matmul %22, %7, %cst_11 {dimension_numbers = #tpu.dot_dimension_numbers<[1], [0], [0], [1], [0, 0, 1, 1], [], []>} : vector<8x8xbf16>, vector<8x64xbf16>, vector<8x64xf32> -> vector<8x64xf32>
    %24 = arith.truncf %23 : vector<8x64xf32> to vector<8x64xbf16>
    %25 = vector.extract_strided_slice %0 {offsets = [0, 64], sizes = [8, 64], strides = [1, 1]} : vector<8x128xbf16> to vector<8x64xbf16>
    %26 = vector.extract_strided_slice %1 {offsets = [0, 64], sizes = [8, 64], strides = [1, 1]} : vector<8x128xbf16> to vector<8x64xbf16>
    %27 = vector.extract_strided_slice %2 {offsets = [0, 64], sizes = [8, 64], strides = [1, 1]} : vector<8x128xbf16> to vector<8x64xbf16>
    %cst_12 = arith.constant dense<0.000000e+00> : vector<8x8xf32>
    %28 = tpu.matmul %25, %26, %cst_12 {dimension_numbers = #tpu.dot_dimension_numbers<[1], [1], [0], [0], [0, 0, 1, 0], [], []>} : vector<8x64xbf16>, vector<8x64xbf16>, vector<8x8xf32> -> vector<8x8xf32>
    %cst_13 = arith.constant 1.250000e-01 : f32
    %29 = vector.broadcast %cst_13 : f32 to vector<8x8xf32>
    %30 = arith.mulf %28, %29 : vector<8x8xf32>
    %31 = vector.broadcast %4 : vector<1x8xf32> to vector<8x8xf32>
    %32 = arith.addf %30, %31 : vector<8x8xf32>
    %cst_14 = arith.constant dense<0xFF800000> : vector<8xf32>
    %33 = vector.multi_reduction <maximumf>, %32, %cst_14 [1] : vector<8x8xf32> to vector<8xf32>
    %34 = vector.shape_cast %33 : vector<8xf32> to vector<8x1xf32>
    %35 = vector.broadcast %34 : vector<8x1xf32> to vector<8x8xf32>
    %36 = arith.subf %32, %35 : vector<8x8xf32>
    %37 = math.exp %36 : vector<8x8xf32>
    %cst_15 = arith.constant dense<0.000000e+00> : vector<8xf32>
    %38 = vector.multi_reduction <add>, %37, %cst_15 [1] : vector<8x8xf32> to vector<8xf32>
    %39 = vector.shape_cast %38 : vector<8xf32> to vector<8x1xf32>
    %40 = vector.broadcast %39 : vector<8x1xf32> to vector<8x8xf32>
    %41 = arith.divf %37, %40 : vector<8x8xf32>
    %42 = arith.truncf %41 : vector<8x8xf32> to vector<8x8xbf16>
    %cst_16 = arith.constant dense<0.000000e+00> : vector<8x64xf32>
    %43 = tpu.matmul %42, %27, %cst_16 {dimension_numbers = #tpu.dot_dimension_numbers<[1], [0], [0], [1], [0, 0, 1, 1], [], []>} : vector<8x8xbf16>, vector<8x64xbf16>, vector<8x64xf32> -> vector<8x64xf32>
    %44 = arith.truncf %43 : vector<8x64xf32> to vector<8x64xbf16>
    %45 = tpu.concatenate %24, %44 in 1 : vector<8x64xbf16>, vector<8x64xbf16> -> vector<8x128xbf16>
    %c0_17 = arith.constant 0 : index
    %c0_18 = arith.constant 0 : index
    %46 = vector.load %arg6[%c0_17, %c0_18] : memref<8x128xbf16, #tpu.memory_space<vmem>>, vector<8x128xbf16>
    tpu.vector_store %arg6[%c0_17, %c0_18], %45 {strides = array<i32>} : memref<8x128xbf16, #tpu.memory_space<vmem>>, vector<8x128xbf16>,
    return
  }
  func.func @transform_0(%arg0: i32, %arg1: i32) -> (i32, i32) {
    %c1_i32 = arith.constant 1 : i32
    %0 = arith.muli %arg0, %c1_i32 : i32
    %1 = arith.addi %0, %arg1 : i32
    %c0_i32 = arith.constant 0 : i32
    %c0_i32_0 = arith.constant 0 : i32
    return %1, %c0_i32 : i32, i32
  }
  func.func @transform_1(%arg0: i32, %arg1: i32) -> (i32, i32) {
    %c1_i32 = arith.constant 1 : i32
    %c0_i32 = arith.constant 0 : i32
    return %arg0, %c1_i32 : i32, i32
  }
  func.func @transform_2(%arg0: i32, %arg1: i32) -> (i32, i32) {
    %c2_i32 = arith.constant 2 : i32
    %c0_i32 = arith.constant 0 : i32
    return %arg0, %c2_i32 : i32, i32
  }
  func.func @transform_3(%arg0: i32, %arg1: i32) -> (i32, i32, i32) {
    %c0_i32 = arith.constant 0 : i32
    %c0_i32_0 = arith.constant 0 : i32
    %c0_i32_1 = arith.constant 0 : i32
    return %arg0, %c0_i32, %c0_i32_0 : i32, i32, i32
  }
  func.func @transform_4(%arg0: i32, %arg1: i32) -> (i32, i32) {
    %c1_i32 = arith.constant 1 : i32
    %0 = arith.muli %arg0, %c1_i32 : i32
    %1 = arith.addi %0, %arg1 : i32
    %c0_i32 = arith.constant 0 : i32
    %c0_i32_0 = arith.constant 0 : i32
    return %1, %c0_i32 : i32, i32
  }
}

module attributes {stable_mosaic.version = 11 : i64} {
  func.func @_ffn_ln_kernel(%arg0: i32, %arg1: i32, %arg2: memref<16x128xbf16, #tpu.memory_space<vmem>>, %arg3: memref<128x512xbf16, #tpu.memory_space<vmem>>, %arg4: memref<1x512xf32, #tpu.memory_space<vmem>>, %arg5: memref<512x128xbf16, #tpu.memory_space<vmem>>, %arg6: memref<1x128xf32, #tpu.memory_space<vmem>>, %arg7: memref<16x128xbf16, #tpu.memory_space<vmem>>, %arg8: memref<1x128xf32, #tpu.memory_space<vmem>>, %arg9: memref<1x128xf32, #tpu.memory_space<vmem>>, %arg10: memref<16x128xbf16, #tpu.memory_space<vmem>>, %arg11: memref<16x128xf32, #tpu.memory_space<vmem>>) attributes {dimension_semantics = [#tpu.dimension_semantics<parallel>, #tpu.dimension_semantics<arbitrary>], iteration_bounds = array<i64: 1, 1>, scalar_prefetch = 0 : i64, scratch_operands = 1 : i64, tpu.core_type = #tpu.core_type<tc>, window_params = [{transform_indices = @transform_0, window_bounds = array<i64: 16, 128>}, {transform_indices = @transform_1, window_bounds = array<i64: 128, 512>}, {transform_indices = @transform_2, window_bounds = array<i64: 1, 512>}, {transform_indices = @transform_3, window_bounds = array<i64: 512, 128>}, {pipeline_mode = #tpu.pipeline_mode<synchronous>, transform_indices = @transform_4, window_bounds = array<i64: 1, 128>}, {transform_indices = @transform_5, window_bounds = array<i64: 16, 128>}, {pipeline_mode = #tpu.pipeline_mode<synchronous>, transform_indices = @transform_6, window_bounds = array<i64: 1, 128>}, {pipeline_mode = #tpu.pipeline_mode<synchronous>, transform_indices = @transform_7, window_bounds = array<i64: 1, 128>}, {transform_indices = @transform_8, window_bounds = array<i64: 16, 128>}]} {
    %c0_i32 = arith.constant 0 : i32
    %0 = arith.cmpi eq, %arg1, %c0_i32 : i32
    %1 = arith.extui %0 : i1 to i32
    %c0_i32_0 = arith.constant 0 : i32
    %2 = arith.cmpi ne, %1, %c0_i32_0 : i32
    scf.if %2 {
      %cst_19 = arith.constant 0.000000e+00 : f32
      %31 = vector.broadcast %cst_19 : f32 to vector<16x128xf32>
      %c0_20 = arith.constant 0 : index
      %c0_21 = arith.constant 0 : index
      %32 = vector.load %arg11[%c0_20, %c0_21] : memref<16x128xf32, #tpu.memory_space<vmem>>, vector<16x128xf32>
      tpu.vector_store %arg11[%c0_20, %c0_21], %31 {strides = array<i32>} : memref<16x128xf32, #tpu.memory_space<vmem>>, vector<16x128xf32>,
    } else {
    }
    %c0 = arith.constant 0 : index
    %c0_1 = arith.constant 0 : index
    %3 = vector.load %arg2[%c0, %c0_1] : memref<16x128xbf16, #tpu.memory_space<vmem>>, vector<16x128xbf16>
    %c0_2 = arith.constant 0 : index
    %c0_3 = arith.constant 0 : index
    %4 = vector.load %arg3[%c0_2, %c0_3] : memref<128x512xbf16, #tpu.memory_space<vmem>>, vector<128x512xbf16>
    %cst = arith.constant dense<0.000000e+00> : vector<16x512xf32>
    %5 = tpu.matmul %3, %4, %cst {dimension_numbers = #tpu.dot_dimension_numbers<[1], [0], [0], [1], [0, 0, 1, 1], [], []>} : vector<16x128xbf16>, vector<128x512xbf16>, vector<16x512xf32> -> vector<16x512xf32>
    %c0_4 = arith.constant 0 : index
    %c0_5 = arith.constant 0 : index
    %6 = vector.load %arg4[%c0_4, %c0_5] : memref<1x512xf32, #tpu.memory_space<vmem>>, vector<1x512xf32>
    %7 = vector.broadcast %6 : vector<1x512xf32> to vector<16x512xf32>
    %8 = arith.addf %5, %7 : vector<16x512xf32>
    %9 = arith.mulf %8, %8 : vector<16x512xf32>
    %10 = arith.mulf %8, %9 : vector<16x512xf32>
    %cst_6 = arith.constant 4.471500e-02 : f32
    %11 = vector.broadcast %cst_6 : f32 to vector<16x512xf32>
    %12 = arith.mulf %11, %10 : vector<16x512xf32>
    %13 = arith.addf %8, %12 : vector<16x512xf32>
    %cst_7 = arith.constant 0.797884583 : f32
    %14 = vector.broadcast %cst_7 : f32 to vector<16x512xf32>
    %15 = arith.mulf %14, %13 : vector<16x512xf32>
    %16 = math.tanh %15 : vector<16x512xf32>
    %cst_8 = arith.constant 1.000000e+00 : f32
    %17 = vector.broadcast %cst_8 : f32 to vector<16x512xf32>
    %18 = arith.addf %17, %16 : vector<16x512xf32>
    %cst_9 = arith.constant 5.000000e-01 : f32
    %19 = vector.broadcast %cst_9 : f32 to vector<16x512xf32>
    %20 = arith.mulf %19, %18 : vector<16x512xf32>
    %21 = arith.mulf %8, %20 : vector<16x512xf32>
    %c0_10 = arith.constant 0 : index
    %c0_11 = arith.constant 0 : index
    %22 = vector.load %arg11[%c0_10, %c0_11] : memref<16x128xf32, #tpu.memory_space<vmem>>, vector<16x128xf32>
    %23 = arith.truncf %21 : vector<16x512xf32> to vector<16x512xbf16>
    %c0_12 = arith.constant 0 : index
    %c0_13 = arith.constant 0 : index
    %24 = vector.load %arg5[%c0_12, %c0_13] : memref<512x128xbf16, #tpu.memory_space<vmem>>, vector<512x128xbf16>
    %cst_14 = arith.constant dense<0.000000e+00> : vector<16x128xf32>
    %25 = tpu.matmul %23, %24, %cst_14 {dimension_numbers = #tpu.dot_dimension_numbers<[1], [0], [0], [1], [0, 0, 1, 1], [], []>} : vector<16x512xbf16>, vector<512x128xbf16>, vector<16x128xf32> -> vector<16x128xf32>
    %26 = arith.addf %22, %25 : vector<16x128xf32>
    %c0_15 = arith.constant 0 : index
    %c0_16 = arith.constant 0 : index
    %27 = vector.load %arg11[%c0_15, %c0_16] : memref<16x128xf32, #tpu.memory_space<vmem>>, vector<16x128xf32>
    tpu.vector_store %arg11[%c0_15, %c0_16], %26 {strides = array<i32>} : memref<16x128xf32, #tpu.memory_space<vmem>>, vector<16x128xf32>,
    %c0_i32_17 = arith.constant 0 : i32
    %28 = arith.cmpi eq, %arg1, %c0_i32_17 : i32
    %29 = arith.extui %28 : i1 to i32
    %c0_i32_18 = arith.constant 0 : i32
    %30 = arith.cmpi ne, %29, %c0_i32_18 : i32
    scf.if %30 {
      %c0_19 = arith.constant 0 : index
      %c0_20 = arith.constant 0 : index
      %31 = vector.load %arg11[%c0_19, %c0_20] : memref<16x128xf32, #tpu.memory_space<vmem>>, vector<16x128xf32>
      %c0_21 = arith.constant 0 : index
      %c0_22 = arith.constant 0 : index
      %32 = vector.load %arg6[%c0_21, %c0_22] : memref<1x128xf32, #tpu.memory_space<vmem>>, vector<1x128xf32>
      %33 = vector.broadcast %32 : vector<1x128xf32> to vector<16x128xf32>
      %34 = arith.addf %31, %33 : vector<16x128xf32>
      %c0_23 = arith.constant 0 : index
      %c0_24 = arith.constant 0 : index
      %35 = vector.load %arg7[%c0_23, %c0_24] : memref<16x128xbf16, #tpu.memory_space<vmem>>, vector<16x128xbf16>
      %36 = arith.extf %35 : vector<16x128xbf16> to vector<16x128xf32>
      %37 = arith.addf %34, %36 : vector<16x128xf32>
      %cst_25 = arith.constant dense<0.000000e+00> : vector<16xf32>
      %38 = vector.multi_reduction <add>, %37, %cst_25 [1] : vector<16x128xf32> to vector<16xf32>
      %39 = vector.shape_cast %38 : vector<16xf32> to vector<16x1xf32>
      %cst_26 = arith.constant 1.280000e+02 : f32
      %40 = vector.broadcast %cst_26 : f32 to vector<16x1xf32>
      %41 = arith.divf %39, %40 : vector<16x1xf32>
      %42 = vector.broadcast %41 : vector<16x1xf32> to vector<16x128xf32>
      %43 = arith.subf %37, %42 : vector<16x128xf32>
      %44 = arith.mulf %43, %43 : vector<16x128xf32>
      %cst_27 = arith.constant dense<0.000000e+00> : vector<16xf32>
      %45 = vector.multi_reduction <add>, %44, %cst_27 [1] : vector<16x128xf32> to vector<16xf32>
      %46 = vector.shape_cast %45 : vector<16xf32> to vector<16x1xf32>
      %cst_28 = arith.constant 1.280000e+02 : f32
      %47 = vector.broadcast %cst_28 : f32 to vector<16x1xf32>
      %48 = arith.divf %46, %47 : vector<16x1xf32>
      %49 = vector.broadcast %41 : vector<16x1xf32> to vector<16x128xf32>
      %50 = arith.subf %37, %49 : vector<16x128xf32>
      %cst_29 = arith.constant 9.99999996E-13 : f32
      %51 = vector.broadcast %cst_29 : f32 to vector<16x1xf32>
      %52 = arith.addf %48, %51 : vector<16x1xf32>
      %53 = math.rsqrt %52 : vector<16x1xf32>
      %54 = vector.broadcast %53 : vector<16x1xf32> to vector<16x128xf32>
      %55 = arith.mulf %50, %54 : vector<16x128xf32>
      %c0_30 = arith.constant 0 : index
      %c0_31 = arith.constant 0 : index
      %56 = vector.load %arg8[%c0_30, %c0_31] : memref<1x128xf32, #tpu.memory_space<vmem>>, vector<1x128xf32>
      %57 = vector.broadcast %56 : vector<1x128xf32> to vector<16x128xf32>
      %58 = arith.mulf %55, %57 : vector<16x128xf32>
      %c0_32 = arith.constant 0 : index
      %c0_33 = arith.constant 0 : index
      %59 = vector.load %arg9[%c0_32, %c0_33] : memref<1x128xf32, #tpu.memory_space<vmem>>, vector<1x128xf32>
      %60 = vector.broadcast %59 : vector<1x128xf32> to vector<16x128xf32>
      %61 = arith.addf %58, %60 : vector<16x128xf32>
      %62 = arith.truncf %61 : vector<16x128xf32> to vector<16x128xbf16>
      %c0_34 = arith.constant 0 : index
      %c0_35 = arith.constant 0 : index
      %63 = vector.load %arg10[%c0_34, %c0_35] : memref<16x128xbf16, #tpu.memory_space<vmem>>, vector<16x128xbf16>
      tpu.vector_store %arg10[%c0_34, %c0_35], %62 {strides = array<i32>} : memref<16x128xbf16, #tpu.memory_space<vmem>>, vector<16x128xbf16>,
    } else {
    }
    return
  }
  func.func @transform_0(%arg0: i32, %arg1: i32) -> (i32, i32) {
    %c0_i32 = arith.constant 0 : i32
    %c0_i32_0 = arith.constant 0 : i32
    return %arg0, %c0_i32 : i32, i32
  }
  func.func @transform_1(%arg0: i32, %arg1: i32) -> (i32, i32) {
    %c0_i32 = arith.constant 0 : i32
    %c0_i32_0 = arith.constant 0 : i32
    return %c0_i32, %arg1 : i32, i32
  }
  func.func @transform_2(%arg0: i32, %arg1: i32) -> (i32, i32) {
    %c0_i32 = arith.constant 0 : i32
    %c0_i32_0 = arith.constant 0 : i32
    return %c0_i32, %arg1 : i32, i32
  }
  func.func @transform_3(%arg0: i32, %arg1: i32) -> (i32, i32) {
    %c0_i32 = arith.constant 0 : i32
    %c0_i32_0 = arith.constant 0 : i32
    return %arg1, %c0_i32 : i32, i32
  }
  func.func @transform_4(%arg0: i32, %arg1: i32) -> (i32, i32) {
    %c0_i32 = arith.constant 0 : i32
    %c0_i32_0 = arith.constant 0 : i32
    %c0_i32_1 = arith.constant 0 : i32
    return %c0_i32, %c0_i32_0 : i32, i32
  }
  func.func @transform_5(%arg0: i32, %arg1: i32) -> (i32, i32) {
    %c0_i32 = arith.constant 0 : i32
    %c0_i32_0 = arith.constant 0 : i32
    return %arg0, %c0_i32 : i32, i32
  }
  func.func @transform_6(%arg0: i32, %arg1: i32) -> (i32, i32) {
    %c0_i32 = arith.constant 0 : i32
    %c0_i32_0 = arith.constant 0 : i32
    %c0_i32_1 = arith.constant 0 : i32
    return %c0_i32, %c0_i32_0 : i32, i32
  }
  func.func @transform_7(%arg0: i32, %arg1: i32) -> (i32, i32) {
    %c0_i32 = arith.constant 0 : i32
    %c0_i32_0 = arith.constant 0 : i32
    %c0_i32_1 = arith.constant 0 : i32
    return %c0_i32, %c0_i32_0 : i32, i32
  }
  func.func @transform_8(%arg0: i32, %arg1: i32) -> (i32, i32) {
    %c0_i32 = arith.constant 0 : i32
    %c0_i32_0 = arith.constant 0 : i32
    return %arg0, %c0_i32 : i32, i32
  }
}

module attributes {stable_mosaic.version = 11 : i64} {
  func.func @_head_kernel(%arg0: memref<8x128xbf16, #tpu.memory_space<vmem>>, %arg1: memref<128x128xbf16, #tpu.memory_space<vmem>>, %arg2: memref<1x128xf32, #tpu.memory_space<vmem>>, %arg3: memref<128x128xbf16, #tpu.memory_space<vmem>>, %arg4: memref<1x128xf32, #tpu.memory_space<vmem>>, %arg5: memref<8x128xf32, #tpu.memory_space<vmem>>) attributes {dimension_semantics = [], scalar_prefetch = 0 : i64, scratch_operands = 0 : i64, tpu.core_type = #tpu.core_type<tc>} {
    %c0 = arith.constant 0 : index
    %c0_0 = arith.constant 0 : index
    %0 = vector.load %arg0[%c0, %c0_0] : memref<8x128xbf16, #tpu.memory_space<vmem>>, vector<8x128xbf16>
    %c0_1 = arith.constant 0 : index
    %c0_2 = arith.constant 0 : index
    %1 = vector.load %arg1[%c0_1, %c0_2] : memref<128x128xbf16, #tpu.memory_space<vmem>>, vector<128x128xbf16>
    %cst = arith.constant dense<0.000000e+00> : vector<8x128xf32>
    %2 = tpu.matmul %0, %1, %cst {dimension_numbers = #tpu.dot_dimension_numbers<[1], [0], [0], [1], [0, 0, 1, 1], [], []>} : vector<8x128xbf16>, vector<128x128xbf16>, vector<8x128xf32> -> vector<8x128xf32>
    %c0_3 = arith.constant 0 : index
    %c0_4 = arith.constant 0 : index
    %3 = vector.load %arg2[%c0_3, %c0_4] : memref<1x128xf32, #tpu.memory_space<vmem>>, vector<1x128xf32>
    %4 = vector.broadcast %3 : vector<1x128xf32> to vector<8x128xf32>
    %5 = arith.addf %2, %4 : vector<8x128xf32>
    %cst_5 = arith.constant 0.000000e+00 : f32
    %6 = vector.broadcast %cst_5 : f32 to vector<8x128xf32>
    %7 = arith.maximumf %5, %6 : vector<8x128xf32>
    %8 = arith.truncf %7 : vector<8x128xf32> to vector<8x128xbf16>
    %c0_6 = arith.constant 0 : index
    %c0_7 = arith.constant 0 : index
    %9 = vector.load %arg3[%c0_6, %c0_7] : memref<128x128xbf16, #tpu.memory_space<vmem>>, vector<128x128xbf16>
    %cst_8 = arith.constant dense<0.000000e+00> : vector<8x128xf32>
    %10 = tpu.matmul %8, %9, %cst_8 {dimension_numbers = #tpu.dot_dimension_numbers<[1], [0], [0], [1], [0, 0, 1, 1], [], []>} : vector<8x128xbf16>, vector<128x128xbf16>, vector<8x128xf32> -> vector<8x128xf32>
    %c0_9 = arith.constant 0 : index
    %c0_10 = arith.constant 0 : index
    %11 = vector.load %arg4[%c0_9, %c0_10] : memref<1x128xf32, #tpu.memory_space<vmem>>, vector<1x128xf32>
    %12 = vector.broadcast %11 : vector<1x128xf32> to vector<8x128xf32>
    %13 = arith.addf %10, %12 : vector<8x128xf32>
    %c0_11 = arith.constant 0 : index
    %c0_12 = arith.constant 0 : index
    %14 = vector.load %arg5[%c0_11, %c0_12] : memref<8x128xf32, #tpu.memory_space<vmem>>, vector<8x128xf32>
    tpu.vector_store %arg5[%c0_11, %c0_12], %13 {strides = array<i32>} : memref<8x128xf32, #tpu.memory_space<vmem>>, vector<8x128xf32>,
    return
  }
}

</mosaic_0001>

<llo_original>
// kernel: model_classifier_forward.10
$region0: #{model_classifier_forward.10}
  #allocation0 [shape = 'u32[]', space=smem, size = 0x4, offset = 0x4, fixed_abs, tag = 'smem constant byte address 0x4 - core index']
  #allocation1 [shape = 'u32[72,128]{1,0:T(1,128)}', space=vmem, size = 0x9000, scoped, tag = 'internal scratch']
  %s0 = inlined_call_operand.vmem [shape: bf16[16,384], index: 0, kind: input, shape index: {}, may-alias: {0,1,2}]
  %s1 = inlined_call_operand.vmem [shape: bf16[16,384], index: 1, kind: input, shape index: {}, may-alias: {0,1,2}]
  %s2 = inlined_call_operand.vmem [shape: bf16[16,384], index: 2, kind: input, shape index: {}, may-alias: {0,1,2}]
  %s3 = inlined_call_operand.vmem [shape: f32[2,1,8], index: 3, kind: input, shape index: {}]
  %s4 = inlined_call_operand.vmem [shape: bf16[16,128], index: 4, kind: output, shape index: {}]
  %s5 = sld [smem:[#allocation0]]
  $region49: #{model_classifier_forward.10} parent=0
    _
  %s7 = ssub.s32 1, %s5
  %s8 = scalar_select 0, %s7, %s5
  loop: start=0, step=1, limit=4
  $region2: #{model_classifier_forward.10} parent=0 // loop_pre_header
    _
  $region3: #{model_classifier_forward.10} parent=0 // loop_header
    %s10 = sphi 0, %s14
    %p11 = scmp.ge.s32.totalorder %s10, 4
    %s17 = sphi 0, %s29
    %s18 = sphi 0, %s25
    %s19 = sphi 0, %s17
    %s20 = sphi 0, %s18
    %s21 = sphi 0, %s19
    %s22 = sphi 0, %s20
    %s34 = sphi 0, %s36
    %s37 = sphi 0, %s34
    %s38 = sphi 0, %s37
    %s54 = sphi 0, %s38
    %s60 = sphi 0, %s62
    %s63 = sphi 0, %s60
    %s64 = sphi 0, %s63
    %s80 = sphi 0, %s64
    %s86 = sphi 0, %s88
    %s89 = sphi 0, %s86
    %s90 = sphi 0, %s89
    %s106 = sphi 0, %s90
    %s112 = sphi 0, %s114
    %s115 = sphi 0, %s112
    %s116 = sphi 0, %s115
    %s132 = sphi 0, %s116
    %s140 = sphi 0, %s142
    %s143 = sphi 0, %s140
    %s144 = sphi 0, %s143
    %s160 = sphi 0, %s144
  $region4: #{model_classifier_forward.10} parent=0 // loop_header_branch
    %13 = sbr.rel (%p11) target = $region8
  $region5: #{model_classifier_forward.10} parent=0 // loop_body
    %s15 = ssub.s32 %s10, 1
    %s16 = ssub.s32 %s10, 2
    %s23 = sadd.s32 1, %s18
    %p24 = scmp.ge.s32.totalorder %s23, 1
    %s25 = scalar_select %p24, 0, %s23
    %s26 = sadd.s32 1, %s17
    %s27 = scalar_select %p24, %s26, %s17
    %p28 = scmp.ge.s32.totalorder %s27, 2
    %s29 = scalar_select %p28, 0, %s27
    %s30 = sadd.s32 %s17, %s18
    %s31 = sadd.s32 %s29, %s25
    %s32 = ssub.s32 %s30, %s31
    %p33 = scmp.eq.s32.totalorder %s32, 0
    %s35 = sadd.s32 %s34, 1
    %s36 = scalar_select %p33, %s34, %s35
    %p39 = pneg %p33
    %p40 = scmp.eq.s32.totalorder %s10, 1
    %p41 = por %p39, %p40
    %p42 = scmp.ne.s32.totalorder %s34, %s37
    %p43 = scmp.eq.s32.totalorder %s10, 0
    %p44 = por %p42, %p43
    %p45 = scmp.ne.s32.totalorder %s34, %s37
    %p46 = scmp.eq.s32.totalorder %s15, 1
    %p47 = por %p45, %p46
    %p48 = scmp.ne.s32.totalorder %s37, %s38
    %p49 = scmp.eq.s32.totalorder %s15, 0
    %p50 = por %p48, %p49
    %p51 = scmp.ne.s32.totalorder %s37, %s38
    %p52 = scmp.eq.s32.totalorder %s16, 1
    %p53 = por %p51, %p52
    %p55 = scmp.ne.s32.totalorder %s38, %s54
    %p56 = scmp.eq.s32.totalorder %s16, 0
    %p57 = por %p55, %p56
    %s58 = ssub.s32 %s17, %s29
    %p59 = scmp.eq.s32.totalorder %s58, 0
    %s61 = sadd.s32 %s60, 1
    %s62 = scalar_select %p59, %s60, %s61
    %p65 = pneg %p59
    %p66 = scmp.eq.s32.totalorder %s10, 1
    %p67 = por %p65, %p66
    %p68 = scmp.ne.s32.totalorder %s60, %s63
    %p69 = scmp.eq.s32.totalorder %s10, 0
    %p70 = por %p68, %p69
    %p71 = scmp.ne.s32.totalorder %s60, %s63
    %p72 = scmp.eq.s32.totalorder %s15, 1
    %p73 = por %p71, %p72
    %p74 = scmp.ne.s32.totalorder %s63, %s64
    %p75 = scmp.eq.s32.totalorder %s15, 0
    %p76 = por %p74, %p75
    %p77 = scmp.ne.s32.totalorder %s63, %s64
    %p78 = scmp.eq.s32.totalorder %s16, 1
    %p79 = por %p77, %p78
    %p81 = scmp.ne.s32.totalorder %s64, %s80
    %p82 = scmp.eq.s32.totalorder %s16, 0
    %p83 = por %p81, %p82
    %s84 = ssub.s32 %s17, %s29
    %p85 = scmp.eq.s32.totalorder %s84, 0
    %s87 = sadd.s32 %s86, 1
    %s88 = scalar_select %p85, %s86, %s87
    %p91 = pneg %p85
    %p92 = scmp.eq.s32.totalorder %s10, 1
    %p93 = por %p91, %p92
    %p94 = scmp.ne.s32.totalorder %s86, %s89
    %p95 = scmp.eq.s32.totalorder %s10, 0
    %p96 = por %p94, %p95
    %p97 = scmp.ne.s32.totalorder %s86, %s89
    %p98 = scmp.eq.s32.totalorder %s15, 1
    %p99 = por %p97, %p98
    %p100 = scmp.ne.s32.totalorder %s89, %s90
    %p101 = scmp.eq.s32.totalorder %s15, 0
    %p102 = por %p100, %p101
    %p103 = scmp.ne.s32.totalorder %s89, %s90
    %p104 = scmp.eq.s32.totalorder %s16, 1
    %p105 = por %p103, %p104
    %p107 = scmp.ne.s32.totalorder %s90, %s106
    %p108 = scmp.eq.s32.totalorder %s16, 0
    %p109 = por %p107, %p108
    %s110 = ssub.s32 %s17, %s29
    %p111 = scmp.eq.s32.totalorder %s110, 0
    %s113 = sadd.s32 %s112, 1
    %s114 = scalar_select %p111, %s112, %s113
    %p117 = pneg %p111
    %p118 = scmp.eq.s32.totalorder %s10, 1
    %p119 = por %p117, %p118
    %p120 = scmp.ne.s32.totalorder %s112, %s115
    %p121 = scmp.eq.s32.totalorder %s10, 0
    %p122 = por %p120, %p121
    %p123 = scmp.ne.s32.totalorder %s112, %s115
    %p124 = scmp.eq.s32.totalorder %s15, 1
    %p125 = por %p123, %p124
    %p126 = scmp.ne.s32.totalorder %s115, %s116
    %p127 = scmp.eq.s32.totalorder %s15, 0
    %p128 = por %p126, %p127
    %p129 = scmp.ne.s32.totalorder %s115, %s116
    %p130 = scmp.eq.s32.totalorder %s16, 1
    %p131 = por %p129, %p130
    %p133 = scmp.ne.s32.totalorder %s116, %s132
    %p134 = scmp.eq.s32.totalorder %s16, 0
    %p135 = por %p133, %p134
    %s136 = sadd.s32 %s17, %s18
    %s137 = sadd.s32 %s29, %s25
    %s138 = ssub.s32 %s136, %s137
    %p139 = scmp.eq.s32.totalorder %s138, 0
    %s141 = sadd.s32 %s140, 1
    %s142 = scalar_select %p139, %s140, %s141
    %p145 = pneg %p139
    %p146 = scmp.eq.s32.totalorder %s10, 1
    %p147 = por %p145, %p146
    %p148 = scmp.ne.s32.totalorder %s140, %s143
    %p149 = scmp.eq.s32.totalorder %s10, 0
    %p150 = por %p148, %p149
    %p151 = scmp.ne.s32.totalorder %s140, %s143
    %p152 = scmp.eq.s32.totalorder %s15, 1
    %p153 = por %p151, %p152
    %p154 = scmp.ne.s32.totalorder %s143, %s144
    %p155 = scmp.eq.s32.totalorder %s15, 0
    %p156 = por %p154, %p155
    %p157 = scmp.ne.s32.totalorder %s143, %s144
    %p158 = scmp.eq.s32.totalorder %s16, 1
    %p159 = por %p157, %p158
    %p161 = scmp.ne.s32.totalorder %s144, %s160
    %p162 = scmp.eq.s32.totalorder %s16, 0
    %p163 = por %p161, %p162
    %p164 = scmp.le.s32.totalorder 1, %s10
    %p165 = scmp.lt.s32.totalorder %s10, 3
    %p166 = pnand %p164, %p165
    %p167 = pneg %p166
    // Predicated region
    $region9: #{model_classifier_forward.10} parent=5 // pred_check
      _
    $region10: #{model_classifier_forward.10} parent=5 // pred_check_branch
      %169 = sbr.rel (%p166) target = $region12
    $region11: #{model_classifier_forward.10} parent=5 // pred_region
      %s170 = ssub.s32 %s10, 1
    $region12: #{model_classifier_forward.10} parent=5 // pred_fallthru
      _
    %p171 = scmp.lt.s32.totalorder %s10, 2
    // Predicated region
    $region13: #{model_classifier_forward.10} parent=5 // pred_check
      %p172 = pneg %p171
    $region14: #{model_classifier_forward.10} parent=5 // pred_check_branch
      %174 = sbr.rel (%p172) target = $region16
    $region15: #{model_classifier_forward.10} parent=5 // pred_region
      // Predicated region
      $region17: #{model_classifier_forward.10} parent=15 // pred_check
        %p175 = pneg %p44
      $region18: #{model_classifier_forward.10} parent=15 // pred_check_branch
        %177 = sbr.rel (%p175) target = $region20
      $region19: #{model_classifier_forward.10} parent=15 // pred_region
        %s178 = sadd.s32 %s17, %s18
        %p179 = scmp.lt.s32.totalorder %s178, 1
        %s180 = scalar_select %p179, %s178, 1
        %s181 = smul.addr %s180, 3
        %s182 = smul.addr %s181, 4
        %s183 = scalar_lea.vmem %s0, %s182
        %s184 = sadd.s32 %s17, %s18
      $region20: #{model_classifier_forward.10} parent=15 // pred_fallthru
        _
      // Predicated region
      $region21: #{model_classifier_forward.10} parent=15 // pred_check
        %p185 = pneg %p70
      $region22: #{model_classifier_forward.10} parent=15 // pred_check_branch
        %187 = sbr.rel (%p185) target = $region24
      $region23: #{model_classifier_forward.10} parent=15 // pred_region
        %p188 = scmp.lt.s32.totalorder %s17, 1
        %s189 = scalar_select %p188, %s17, 1
        %s190 = smul.addr %s189, 3
        %s191 = sadd.s32 1, %s190
        %s192 = smul.addr %s191, 4
        %s193 = scalar_lea.vmem %s1, %s192
      $region24: #{model_classifier_forward.10} parent=15 // pred_fallthru
        _
      // Predicated region
      $region25: #{model_classifier_forward.10} parent=15 // pred_check
        %p194 = pneg %p96
      $region26: #{model_classifier_forward.10} parent=15 // pred_check_branch
        %196 = sbr.rel (%p194) target = $region28
      $region27: #{model_classifier_forward.10} parent=15 // pred_region
        %p197 = scmp.lt.s32.totalorder %s17, 1
        %s198 = scalar_select %p197, %s17, 1
        %s199 = smul.addr %s198, 3
        %s200 = sadd.s32 2, %s199
        %s201 = smul.addr %s200, 4
        %s202 = scalar_lea.vmem %s2, %s201
      $region28: #{model_classifier_forward.10} parent=15 // pred_fallthru
        _
      // Predicated region
      $region29: #{model_classifier_forward.10} parent=15 // pred_check
        %p203 = pneg %p122
      $region30: #{model_classifier_forward.10} parent=15 // pred_check_branch
        %205 = sbr.rel (%p203) target = $region32
      $region31: #{model_classifier_forward.10} parent=15 // pred_region
        %p206 = scmp.lt.s32.totalorder %s17, 1
        %s207 = scalar_select %p206, %s17, 1
        %s208 = scalar_lea.vmem %s3, %s207
      $region32: #{model_classifier_forward.10} parent=15 // pred_fallthru
        _
    $region16: #{model_classifier_forward.10} parent=5 // pred_fallthru
      _
    %p209 = scmp.le.s32.totalorder 1, %s10
    %p210 = scmp.lt.s32.totalorder %s10, 3
    %p211 = pnand %p209, %p210
    %p212 = pneg %p211
    // Predicated region
    $region33: #{model_classifier_forward.10} parent=5 // pred_check
      _
    $region34: #{model_classifier_forward.10} parent=5 // pred_check_branch
      %214 = sbr.rel (%p211) target = $region36
    $region35: #{model_classifier_forward.10} parent=5 // pred_region
      %s215 = ssub.s32 %s10, 1
      %s216 = sadd.s32 %s19, %s20
      %p217 = scmp.lt.s32.totalorder %s216, 1
      %s218 = scalar_select %p217, %s216, 1
      %s219 = smul.addr %s218, 3
      %s220 = smul.addr %s219, 4
      %s221 = scalar_lea.vmem %s0, %s220
      %p222 = pneg %p50
      %p223 = pneg %p47
      %p224 = scmp.lt.s32.totalorder %s19, 1
      %s225 = scalar_select %p224, %s19, 1
      %s226 = smul.addr %s225, 3
      %s227 = sadd.s32 1, %s226
      %s228 = smul.addr %s227, 4
      %s229 = scalar_lea.vmem %s1, %s228
      %p230 = pneg %p76
      %p231 = pneg %p73
      %p232 = scmp.lt.s32.totalorder %s19, 1
      %s233 = scalar_select %p232, %s19, 1
      %s234 = smul.addr %s233, 3
      %s235 = sadd.s32 2, %s234
      %s236 = smul.addr %s235, 4
      %s237 = scalar_lea.vmem %s2, %s236
      %p238 = pneg %p102
      %p239 = pneg %p99
      %p240 = scmp.lt.s32.totalorder %s19, 1
      %s241 = scalar_select %p240, %s19, 1
      %s242 = scalar_lea.vmem %s3, %s241
      %p243 = pneg %p128
      %p244 = pneg %p125
      %p245 = pneg %p156
      %p246 = pneg %p153
      %s247 = sadd.s32 %s19, %s20
      %p248 = scmp.lt.s32.totalorder %s247, 1
      %s249 = scalar_select %p248, %s247, 1
      %s250 = smul.addr %s249, 4
      %s251 = scalar_lea.vmem %s4, %s250
      %s252 = sadd.s32 %s19, %s20
      %p253 = scmp.lt.s32.totalorder %s252, 1
      %s254 = scalar_select %p253, %s252, 1
      %s255 = smul.addr %s254, 3
      %s256 = smul.addr %s255, 4
      %s257 = scalar_lea.vmem %s0, %s256
      %s258 = sadd.s32 %s19, %s20
      %p259 = scmp.lt.s32.totalorder %s19, 1
      %s260 = scalar_select %p259, %s19, 1
      %s261 = smul.addr %s260, 3
      %s262 = sadd.s32 1, %s261
      %s263 = smul.addr %s262, 4
      %s264 = scalar_lea.vmem %s1, %s263
      %p265 = scmp.lt.s32.totalorder %s19, 1
      %s266 = scalar_select %p265, %s19, 1
      %s267 = smul.addr %s266, 3
      %s268 = sadd.s32 2, %s267
      %s269 = smul.addr %s268, 4
      %s270 = scalar_lea.vmem %s2, %s269
      %p271 = scmp.lt.s32.totalorder %s19, 1
      %s272 = scalar_select %p271, %s19, 1
      %s273 = scalar_lea.vmem %s3, %s272
      %s274 = sadd.s32 %s19, %s20
      %p275 = scmp.lt.s32.totalorder %s274, 1
      %s276 = scalar_select %p275, %s274, 1
      %s277 = smul.addr %s276, 4
      %s278 = scalar_lea.vmem %s4, %s277
      %s279 = sadd.s32 %s19, %s20
      %v281 = vld [vmem:[%s257] sm:$0xf]
      %v282 = vld [vmem:[%s264] sm:$0xf]
      %v283 = vld [vmem:[%s270] sm:$0xf]
      %v284 = vld [vmem:[%s273] sm:$0x1]
      %vm285 = vcmask 523264
      %v287 = vsel %vm285, %v281, 0
      %v290 = vsel %vm285, %v282, 0
      %292 = vmatpush.bf16.xpose.msra.mxu0 0
      %293 = vmatpush.bf16.xpose.msra.mxu0 0
      %294 = vmatpush.bf16.xpose.msra.mxu0 0
      %295 = vmatpush.bf16.xpose.msra.mxu0 0
      %296 = vmatpush.bf16.xpose.msra.mxu0 0
      %297 = vmatpush.bf16.xpose.msra.mxu0 0
      %298 = vmatpush.bf16.xpose.msra.mxu0 0
      %299 = vmatpush.bf16.xpose.msra.mxu0 %v290
      %300 = vmatmul.bf16.gmra.mxu0 %v287
      %v301 = vpop.f32.mrf.mxu0
      %v302 = vadd.f32 0.0, %v301
      %v303 = vpop.f32.mrf.mxu0
      %304 = vdwg.mxu0
      %v305 = vmul.f32 %v302, 0.125
      %v307 = vperm.slane %v284, 0
      %v309 = vadd.f32 %v305, %v307
      %vm310 = vcmask 64512
      %v311 = vsel %vm310, %v309, -inf
      %312 = vmax.xlane.f32.xlu0 %v311
      %v313 = vpop.xlane.xlu0 %312
      %v314 = vsub.f32 %v309, %v313
      %v315 = vmul.f32 %v314, 1.442695
      %v316 = vpow.pop %v315
      %v317 = vsel %vm310, %v316, 0.0
      %318 = vadd.xlane.f32.xlu0 %v317
      %v319 = vpop.xlane.xlu0 %318
      %v320 = vrcp.pop %v319
      %v321 = vmul.f32 %v319, %v320
      %v322 = vsub.f32 1.0, %v321
      %v323 = vmul.f32 %v320, %v322
      %v324 = vadd.f32 %v320, %v323
      %vm325 = vweird.f32 %v319
      %vm326 = vweird.f32 %v320
      %vm327 = vmor %vm325, %vm326
      %v328 = vsel %vm327, %v320, %v324
      %v329 = vand.u32 2147483647, %v319
      %vm330 = vcmp.eq.f32.partialorder %v329, 8.507059e+37
      %v331 = vand.u32 %v319, 2147483648
      %v332 = vor.u32 1.1754944e-38, %v331
      %v333 = vsel %vm330, %v332, %v328
      %v334 = vmul.f32 %v316, %v333
      %v335 = vpack.c.bf16 %v334, %v334
      %v337 = vsel %vm310, %v335, 0
      %vm339 = vcmask 1043456
      %v341 = vsel %vm339, %v283, 0
      %343 = vmatpush.bf16.msra.mxu0 0
      %344 = vmatpush.bf16.msra.mxu0 0
      %345 = vmatpush.bf16.msra.mxu0 0
      %346 = vmatpush.bf16.msra.mxu0 0
      %347 = vmatpush.bf16.msra.mxu0 0
      %348 = vmatpush.bf16.msra.mxu0 0
      %349 = vmatpush.bf16.msra.mxu0 0
      %350 = vmatpush.bf16.msra.mxu0 %v341
      %351 = vmatmul.bf16.gmra.mxu0 %v337
      %v352 = vpop.f32.mrf.mxu0
      %v353 = vadd.f32 0.0, %v352
      %v354 = vpop.f32.mrf.mxu0
      %355 = vdwg.mxu0
      %v356 = vpack.c.bf16 %v353, %v353
      %v358 = vunpack.c.l.b16 %v281
      %v359 = vpack.c.b16 %v358, %v358
      %360 = vrot.lane.b32.xlu0 %v359, 64
      %v361 = vpop.permute.xlu0 %360
      %v363 = vunpack.c.l.b16 %v282
      %v364 = vpack.c.b16 %v363, %v363
      %365 = vrot.lane.b32.xlu0 %v364, 64
      %v366 = vpop.permute.xlu0 %365
      %v368 = vsel %vm285, %v361, 0
      %v371 = vsel %vm285, %v366, 0
      %373 = vmatpush.bf16.xpose.msra.mxu0 0
      %374 = vmatpush.bf16.xpose.msra.mxu0 0
      %375 = vmatpush.bf16.xpose.msra.mxu0 0
      %376 = vmatpush.bf16.xpose.msra.mxu0 0
      %377 = vmatpush.bf16.xpose.msra.mxu0 0
      %378 = vmatpush.bf16.xpose.msra.mxu0 0
      %379 = vmatpush.bf16.xpose.msra.mxu0 0
      %380 = vmatpush.bf16.xpose.msra.mxu0 %v371
      %381 = vmatmul.bf16.gmra.mxu0 %v368
      %v382 = vpop.f32.mrf.mxu0
      %v383 = vadd.f32 0.0, %v382
      %v384 = vpop.f32.mrf.mxu0
      %385 = vdwg.mxu0
      %v386 = vmul.f32 %v383, 0.125
      %v387 = vadd.f32 %v386, %v307
      %v388 = vsel %vm310, %v387, -inf
      %389 = vmax.xlane.f32.xlu0 %v388
      %v390 = vpop.xlane.xlu0 %389
      %v391 = vsub.f32 %v387, %v390
      %v392 = vmul.f32 %v391, 1.442695
      %v393 = vpow.pop %v392
      %v394 = vsel %vm310, %v393, 0.0
      %395 = vadd.xlane.f32.xlu0 %v394
      %v396 = vpop.xlane.xlu0 %395
      %v397 = vrcp.pop %v396
      %v398 = vmul.f32 %v396, %v397
      %v399 = vsub.f32 1.0, %v398
      %v400 = vmul.f32 %v397, %v399
      %v401 = vadd.f32 %v397, %v400
      %vm402 = vweird.f32 %v396
      %vm403 = vweird.f32 %v397
      %vm404 = vmor %vm402, %vm403
      %v405 = vsel %vm404, %v397, %v401
      %v406 = vand.u32 2147483647, %v396
      %vm407 = vcmp.eq.f32.partialorder %v406, 8.507059e+37
      %v408 = vand.u32 %v396, 2147483648
      %v409 = vor.u32 1.1754944e-38, %v408
      %v410 = vsel %vm407, %v409, %v405
      %v411 = vmul.f32 %v393, %v410
      %v412 = vpack.c.bf16 %v411, %v411
      %v414 = vunpack.c.l.b16 %v283
      %v415 = vpack.c.b16 %v414, %v414
      %416 = vrot.lane.b32.xlu0 %v415, 64
      %v417 = vpop.permute.xlu0 %416
      %v419 = vsel %vm310, %v412, 0
      %v422 = vsel %vm339, %v417, 0
      %424 = vmatpush.bf16.msra.mxu0 0
      %425 = vmatpush.bf16.msra.mxu0 0
      %426 = vmatpush.bf16.msra.mxu0 0
      %427 = vmatpush.bf16.msra.mxu0 0
      %428 = vmatpush.bf16.msra.mxu0 0
      %429 = vmatpush.bf16.msra.mxu0 0
      %430 = vmatpush.bf16.msra.mxu0 0
      %431 = vmatpush.bf16.msra.mxu0 %v422
      %432 = vmatmul.bf16.gmra.mxu0 %v419
      %v433 = vpop.f32.mrf.mxu0
      %v434 = vadd.f32 0.0, %v433
      %v435 = vpop.f32.mrf.mxu0
      %436 = vdwg.mxu0
      %v437 = vpack.c.bf16 %v434, %v434
      %v439 = vunpack.c.l.b16 %v437
      %v440 = vpack.c.b16 %v439, %v439
      %441 = vrot.lane.b32.xlu0 %v440, 64
      %v442 = vpop.permute.xlu0 %441
      %v445 = vsel %vm285, %v356, %v442
      %447 = vst [vmem:[%s278] sm:$0xf] %v445
      %s448 = sadd.s32 %s19, %s20
      %p449 = scmp.lt.s32.totalorder %s448, 1
      %s450 = scalar_select %p449, %s448, 1
      %s451 = smul.addr %s450, 4
      %s452 = scalar_lea.vmem %s4, %s451
      // Predicated region
      $region37: #{model_classifier_forward.10} parent=35 // pred_check
        %p453 = pneg %p153
      $region38: #{model_classifier_forward.10} parent=35 // pred_check_branch
        %455 = sbr.rel (%p453) target = $region40
      $region39: #{model_classifier_forward.10} parent=35 // pred_region
        %s456 = sadd.s32 %s19, %s20
      $region40: #{model_classifier_forward.10} parent=35 // pred_fallthru
        _
    $region36: #{model_classifier_forward.10} parent=5 // pred_fallthru
      _
    %p457 = scmp.le.s32.totalorder 2, %s10
    // Predicated region
    $region41: #{model_classifier_forward.10} parent=5 // pred_check
      %p458 = pneg %p457
    $region42: #{model_classifier_forward.10} parent=5 // pred_check_branch
      %460 = sbr.rel (%p458) target = $region44
    $region43: #{model_classifier_forward.10} parent=5 // pred_region
      %s461 = ssub.s32 %s10, 2
      // Predicated region
      $region45: #{model_classifier_forward.10} parent=43 // pred_check
        %p462 = pneg %p159
      $region46: #{model_classifier_forward.10} parent=43 // pred_check_branch
        %464 = sbr.rel (%p462) target = $region48
      $region47: #{model_classifier_forward.10} parent=43 // pred_region
        %s465 = sadd.s32 %s21, %s22
        %p466 = scmp.lt.s32.totalorder %s465, 1
        %s467 = scalar_select %p466, %s465, 1
        %s468 = smul.addr %s467, 4
        %s469 = scalar_lea.vmem %s4, %s468
      $region48: #{model_classifier_forward.10} parent=43 // pred_fallthru
        _
    $region44: #{model_classifier_forward.10} parent=5 // pred_fallthru
      _
  $region6: #{model_classifier_forward.10} parent=0 // loop_footer
    %s14 = sadd.s32 1, %s10
  $region7: #{model_classifier_forward.10} parent=0 // loop_footer_branch
    %9 = sbr.rel target = $region3
  $region8: #{model_classifier_forward.10} parent=0 // loop_exit
    _

// kernel: model_classifier_forward.11
$region0: #{model_classifier_forward.11}
  #allocation0 [shape = 'u32[]', space=smem, size = 0x4, offset = 0x4, fixed_abs, tag = 'smem constant byte address 0x4 - core index']
  #allocation1 [shape = 'u32[72,128]{1,0:T(1,128)}', space=vmem, size = 0x9000, scoped, tag = 'internal scratch']
  #allocation2 [shape = 'f32[16,128]{1,0:T(8,128)}', space=vmem, size = 0x2000, scoped, tag = 'scratch operand']
  %s0 = inlined_call_operand.vmem [shape: bf16[16,128], index: 0, kind: input, shape index: {}]
  %s1 = inlined_call_operand.vmem [shape: bf16[128,128], index: 1, kind: input, shape index: {}]
  %s2 = inlined_call_operand.vmem [shape: f32[1,128], index: 2, kind: input, shape index: {}]
  %s3 = inlined_call_operand.vmem [shape: bf16[16,128], index: 3, kind: input, shape index: {}]
  %s4 = inlined_call_operand.vmem [shape: f32[1,128], index: 4, kind: input, shape index: {}]
  %s5 = inlined_call_operand.vmem [shape: f32[1,128], index: 5, kind: input, shape index: {}]
  %s6 = inlined_call_operand.vmem [shape: bf16[16,128], index: 6, kind: output, shape index: {}]
  %s7 = sld [smem:[#allocation0]]
  $region42: #{model_classifier_forward.11} parent=0
    _
  %s9 = ssub.s32 1, %s7
  %s10 = scalar_select 0, %s9, %s7
  // Predicated region
  $region2: #{model_classifier_forward.11} parent=0 // pred_check
    _
  $region3: #{model_classifier_forward.11} parent=0 // pred_check_branch
    %12 = sbr.rel (0) target = $region5
  $region4: #{model_classifier_forward.11} parent=0 // pred_region
    _
  $region5: #{model_classifier_forward.11} parent=0 // pred_fallthru
    _
  // Predicated region
  $region6: #{model_classifier_forward.11} parent=0 // pred_check
    _
  $region7: #{model_classifier_forward.11} parent=0 // pred_check_branch
    %14 = sbr.rel (0) target = $region9
  $region8: #{model_classifier_forward.11} parent=0 // pred_region
    _
  $region9: #{model_classifier_forward.11} parent=0 // pred_fallthru
    _
  // Predicated region
  $region10: #{model_classifier_forward.11} parent=0 // pred_check
    _
  $region11: #{model_classifier_forward.11} parent=0 // pred_check_branch
    %16 = sbr.rel (0) target = $region13
  $region12: #{model_classifier_forward.11} parent=0 // pred_region
    _
  $region13: #{model_classifier_forward.11} parent=0 // pred_fallthru
    _
  // Predicated region
  $region14: #{model_classifier_forward.11} parent=0 // pred_check
    _
  $region15: #{model_classifier_forward.11} parent=0 // pred_check_branch
    %18 = sbr.rel (0) target = $region17
  $region16: #{model_classifier_forward.11} parent=0 // pred_region
    _
  $region17: #{model_classifier_forward.11} parent=0 // pred_fallthru
    _
  // Predicated region
  $region18: #{model_classifier_forward.11} parent=0 // pred_check
    _
  $region19: #{model_classifier_forward.11} parent=0 // pred_check_branch
    %20 = sbr.rel (0) target = $region21
  $region20: #{model_classifier_forward.11} parent=0 // pred_region
    _
  $region21: #{model_classifier_forward.11} parent=0 // pred_fallthru
    _
  // Predicated region
  $region22: #{model_classifier_forward.11} parent=0 // pred_check
    _
  $region23: #{model_classifier_forward.11} parent=0 // pred_check_branch
    %22 = sbr.rel (0) target = $region25
  $region24: #{model_classifier_forward.11} parent=0 // pred_region
    _
  $region25: #{model_classifier_forward.11} parent=0 // pred_fallthru
    _
  %p23 = scmp.eq.s32.totalorder 0, 0
  // Predicated region
  $region26: #{model_classifier_forward.11} parent=0 // pred_check
    %p24 = pneg %p23
  $region27: #{model_classifier_forward.11} parent=0 // pred_check_branch
    %26 = sbr.rel (%p24) target = $region29
  $region28: #{model_classifier_forward.11} parent=0 // pred_region
    %27 = vst [vmem:[#allocation2] sm:$0xff] 0.0
    %28 = vst [vmem:[#allocation2 + $0x8] sm:$0xff] 0.0
  $region29: #{model_classifier_forward.11} parent=0 // pred_fallthru
    _
  %v29 = vld [vmem:[#allocation2] sm:$0xff]
  %v30 = vld [vmem:[#allocation2 + $0x8] sm:$0xff]
  %v31 = vld [vmem:[%s0] sm:$0xf]
  %v32 = vld [vmem:[%s0 + $0x4] sm:$0xf]
  %v33 = vld [vmem:[%s1] sm:$0xf]
  %v34 = vld [vmem:[%s1 + $0x4] sm:$0xf]
  %v35 = vld [vmem:[%s1 + $0x8] sm:$0xf]
  %v36 = vld [vmem:[%s1 + $0xc] sm:$0xf]
  %v37 = vld [vmem:[%s1 + $0x10] sm:$0xf]
  %v38 = vld [vmem:[%s1 + $0x14] sm:$0xf]
  %v39 = vld [vmem:[%s1 + $0x18] sm:$0xf]
  %v40 = vld [vmem:[%s1 + $0x1c] sm:$0xf]
  %v41 = vld [vmem:[%s1 + $0x20] sm:$0xf]
  %v42 = vld [vmem:[%s1 + $0x24] sm:$0xf]
  %v43 = vld [vmem:[%s1 + $0x28] sm:$0xf]
  %v44 = vld [vmem:[%s1 + $0x2c] sm:$0xf]
  %v45 = vld [vmem:[%s1 + $0x30] sm:$0xf]
  %v46 = vld [vmem:[%s1 + $0x34] sm:$0xf]
  %v47 = vld [vmem:[%s1 + $0x38] sm:$0xf]
  %v48 = vld [vmem:[%s1 + $0x3c] sm:$0xf]
  %v51 = vunpack.c.l.b16 %v31
  %v52 = vunpack.c.l.b16 %v32
  %v53 = vpack.c.b16 %v52, %v51
  %v71 = vunpack.c.l.b16 %v33
  %v72 = vunpack.c.l.b16 %v34
  %v73 = vunpack.c.l.b16 %v35
  %v74 = vunpack.c.l.b16 %v36
  %v75 = vunpack.c.l.b16 %v37
  %v76 = vunpack.c.l.b16 %v38
  %v77 = vunpack.c.l.b16 %v39
  %v78 = vunpack.c.l.b16 %v40
  %v79 = vunpack.c.l.b16 %v41
  %v80 = vunpack.c.l.b16 %v42
  %v81 = vunpack.c.l.b16 %v43
  %v82 = vunpack.c.l.b16 %v44
  %v83 = vunpack.c.l.b16 %v45
  %v84 = vunpack.c.l.b16 %v46
  %v85 = vunpack.c.l.b16 %v47
  %v86 = vunpack.c.l.b16 %v48
  %v87 = vpack.c.b16 %v72, %v71
  %v88 = vpack.c.b16 %v74, %v73
  %v89 = vpack.c.b16 %v76, %v75
  %v90 = vpack.c.b16 %v78, %v77
  %v91 = vpack.c.b16 %v80, %v79
  %v92 = vpack.c.b16 %v82, %v81
  %v93 = vpack.c.b16 %v84, %v83
  %v94 = vpack.c.b16 %v86, %v85
  %103 = vmatpush.bf16.msra.mxu0 %v94
  %104 = vmatpush.bf16.msra.mxu0 %v93
  %105 = vmatpush.bf16.msra.mxu0 %v92
  %106 = vmatpush.bf16.msra.mxu0 %v91
  %107 = vmatpush.bf16.msra.mxu0 %v90
  %108 = vmatpush.bf16.msra.mxu0 %v89
  %109 = vmatpush.bf16.msra.mxu0 %v88
  %110 = vmatpush.bf16.msra.mxu0 %v87
  %111 = vmatmul.bf16.gmra.mxu0 %v53
  %v112 = vpop.f32.mrf.mxu0
  %v113 = vadd.f32 0.0, %v112
  %v114 = vpop.f32.mrf.mxu0
  %v115 = vadd.f32 0.0, %v114
  %116 = vdwg.mxu0
  %v117 = vadd.f32 %v29, %v113
  %v118 = vadd.f32 %v30, %v115
  %119 = vst [vmem:[#allocation2] sm:$0xff] %v117
  %120 = vst [vmem:[#allocation2 + $0x8] sm:$0xff] %v118
  // Predicated region
  $region30: #{model_classifier_forward.11} parent=0 // pred_check
    %p121 = pneg %p23
  $region31: #{model_classifier_forward.11} parent=0 // pred_check_branch
    %123 = sbr.rel (%p121) target = $region33
  $region32: #{model_classifier_forward.11} parent=0 // pred_region
    %v124 = vld [vmem:[#allocation2] sm:$0xff]
    %v125 = vld [vmem:[#allocation2 + $0x8] sm:$0xff]
    %v126 = vld [vmem:[%s2] sm:$0x1]
    %v128 = vperm.slane %v126, 0
    %v130 = vadd.f32 %v124, %v128
    %v131 = vadd.f32 %v125, %v128
    %v132 = vld [vmem:[%s3] sm:$0xf]
    %v133 = vld [vmem:[%s3 + $0x4] sm:$0xf]
    %v134 = vunpack.c.l.bf16 %v132
    %v135 = vunpack.c.l.bf16 %v133
    %v136 = vadd.f32 %v130, %v134
    %v137 = vadd.f32 %v131, %v135
    %138 = vadd.xlane.f32.xlu0 %v136
    %v139 = vpop.xlane.xlu0 %138
    %140 = vadd.xlane.f32.xlu0 %v137
    %v141 = vpop.xlane.xlu0 %140
    %v142 = vrcp.pop 128.0
    %v143 = vmul.f32 128.0, %v142
    %v144 = vsub.f32 1.0, %v143
    %v145 = vmul.f32 %v142, %v144
    %v146 = vadd.f32 %v142, %v145
    %vm147 = vweird.f32 %v142
    %v148 = vsel %vm147, %v142, %v146
    %v149 = vmul.f32 %v139, %v148
    %v150 = vmul.f32 %v141, %v148
    %v151 = vsub.f32 %v136, %v149
    %v152 = vsub.f32 %v137, %v150
    %v153 = vmul.f32 %v151, %v151
    %v154 = vmul.f32 %v152, %v152
    %155 = vadd.xlane.f32.xlu0 %v153
    %v156 = vpop.xlane.xlu0 %155
    %157 = vadd.xlane.f32.xlu0 %v154
    %v158 = vpop.xlane.xlu0 %157
    %v159 = vmul.f32 %v156, %v148
    %v160 = vmul.f32 %v158, %v148
    %v161 = vadd.f32 %v159, 1e-12
    %v162 = vadd.f32 %v160, 1e-12
    %v163 = vrsqrt.pop %v161
    %v164 = vmul.f32 %v163, %v161
    %v165 = vmul.f32 %v164, %v163
    %v166 = vmul.f32 0.5, %v165
    %v167 = vsub.f32 1.5, %v166
    %v168 = vmul.f32 %v163, %v167
    %vm169 = vweird.f32 %v161
    %vm170 = vweird.f32 %v163
    %vm171 = vmor %vm169, %vm170
    %v172 = vsel %vm171, %v163, %v168
    %v173 = vrsqrt.pop %v162
    %v174 = vmul.f32 %v173, %v162
    %v175 = vmul.f32 %v174, %v173
    %v176 = vmul.f32 0.5, %v175
    %v177 = vsub.f32 1.5, %v176
    %v178 = vmul.f32 %v173, %v177
    %vm179 = vweird.f32 %v162
    %vm180 = vweird.f32 %v173
    %vm181 = vmor %vm179, %vm180
    %v182 = vsel %vm181, %v173, %v178
    %v183 = vmul.f32 %v151, %v172
    %v184 = vmul.f32 %v152, %v182
    %v185 = vld [vmem:[%s4] sm:$0x1]
    %v187 = vperm.slane %v185, 0
    %v189 = vmul.f32 %v183, %v187
    %v190 = vmul.f32 %v184, %v187
    %v191 = vld [vmem:[%s5] sm:$0x1]
    %v193 = vperm.slane %v191, 0
    %v195 = vadd.f32 %v189, %v193
    %v196 = vadd.f32 %v190, %v193
    %v197 = vpack.c.bf16 %v195, %v195
    %v198 = vpack.c.bf16 %v196, %v196
    %199 = vst [vmem:[%s6] sm:$0xf] %v197
    %200 = vst [vmem:[%s6 + $0x4] sm:$0xf] %v198
  $region33: #{model_classifier_forward.11} parent=0 // pred_fallthru
    _
  // Predicated region
  $region34: #{model_classifier_forward.11} parent=0 // pred_check
    _
  $region35: #{model_classifier_forward.11} parent=0 // pred_check_branch
    %202 = sbr.rel (0) target = $region37
  $region36: #{model_classifier_forward.11} parent=0 // pred_region
    _
  $region37: #{model_classifier_forward.11} parent=0 // pred_fallthru
    _
  // Predicated region
  $region38: #{model_classifier_forward.11} parent=0 // pred_check
    _
  $region39: #{model_classifier_forward.11} parent=0 // pred_check_branch
    %204 = sbr.rel (0) target = $region41
  $region40: #{model_classifier_forward.11} parent=0 // pred_region
    _
  $region41: #{model_classifier_forward.11} parent=0 // pred_fallthru
    _

// kernel: model_classifier_forward.9
$region0: #{model_classifier_forward.9}
  #allocation0 [shape = 'u32[]', space=smem, size = 0x4, offset = 0x4, fixed_abs, tag = 'smem constant byte address 0x4 - core index']
  #allocation1 [shape = 'u32[72,128]{1,0:T(1,128)}', space=vmem, size = 0x9000, scoped, tag = 'internal scratch']
  #allocation2 [shape = 'f32[16,384]{1,0:T(8,128)}', space=vmem, size = 0x6000, scoped, tag = 'scratch operand']
  %s0 = inlined_call_operand.vmem [shape: bf16[16,128], index: 0, kind: input, shape index: {}]
  %s1 = inlined_call_operand.hbm [shape: bf16[128,384], index: 1, kind: input, shape index: {}]
  %s2 = inlined_call_operand.vmem [shape: f32[1,384], index: 2, kind: input, shape index: {}]
  %s3 = inlined_call_operand.vmem [shape: bf16[16,384], index: 3, kind: output, shape index: {}]
  %s4 = sld [smem:[#allocation0]]
  $region34: #{model_classifier_forward.9} parent=0
    _
  %s6 = ssub.s32 1, %s4
  %s7 = scalar_select 0, %s6, %s4
  $region1: #{model_classifier_forward.9} parent=0
    #allocation3 [shape = 'u8[98304]{0}', space=vmem, size = 0x18000, scoped, tag = 'input window, operand 1, single buffered']
    #allocation4 [shape = 's32[1]{0}', space=sflag, size = 0x4, scoped, tag = 'scoped memory for model_classifier_forward.9']
    %8 = vsyncpa [#allocation4], 0
    // Predicated region
    $region2: #{model_classifier_forward.9} parent=1 // pred_check
      _
    $region3: #{model_classifier_forward.9} parent=1 // pred_check_branch
      %10 = sbr.rel (0) target = $region5
    $region4: #{model_classifier_forward.9} parent=1 // pred_region
      _
    $region5: #{model_classifier_forward.9} parent=1 // pred_fallthru
      _
    // Predicated region
    $region6: #{model_classifier_forward.9} parent=1 // pred_check
      _
    $region7: #{model_classifier_forward.9} parent=1 // pred_check_branch
      %12 = sbr.rel (0) target = $region9
    $region8: #{model_classifier_forward.9} parent=1 // pred_region
      %14 = vsyncadd [#allocation4], 0
      %s15 = sshll.u32 %s1, 4
      %s16 = int_to_ptr.hbm [resolvable:$true] %s15
      %s17 = sshll.u32 [#allocation3], 4
      %s18 = int_to_ptr.vmem [resolvable:$true] %s17
      %23 = dma.hbm_to_vmem [thread:$0]  %s16, 3072, %s18, [#allocation4], 192, 192, 12
    $region9: #{model_classifier_forward.9} parent=1 // pred_fallthru
      _
    // Predicated region
    $region10: #{model_classifier_forward.9} parent=1 // pred_check
      _
    $region11: #{model_classifier_forward.9} parent=1 // pred_check_branch
      %25 = sbr.rel (0) target = $region13
    $region12: #{model_classifier_forward.9} parent=1 // pred_region
      _
    $region13: #{model_classifier_forward.9} parent=1 // pred_fallthru
      _
    // Predicated region
    $region14: #{model_classifier_forward.9} parent=1 // pred_check
      _
    $region15: #{model_classifier_forward.9} parent=1 // pred_check_branch
      %27 = sbr.rel (0) target = $region17
    $region16: #{model_classifier_forward.9} parent=1 // pred_region
      %29 = dma.done [#allocation4], 3072
    $region17: #{model_classifier_forward.9} parent=1 // pred_fallthru
      _
    %p30 = scmp.eq.s32.totalorder 0, 0
    // Predicated region
    $region18: #{model_classifier_forward.9} parent=1 // pred_check
      %p31 = pneg %p30
    $region19: #{model_classifier_forward.9} parent=1 // pred_check_branch
      %33 = sbr.rel (%p31) target = $region21
    $region20: #{model_classifier_forward.9} parent=1 // pred_region
      %34 = vst [vmem:[#allocation2] sm:$0xff] 0.0
      %35 = vst [vmem:[#allocation2 + $0x8] sm:$0xff] 0.0
      %36 = vst [vmem:[#allocation2 + $0x10] sm:$0xff] 0.0
      %37 = vst [vmem:[#allocation2 + $0x18] sm:$0xff] 0.0
      %38 = vst [vmem:[#allocation2 + $0x20] sm:$0xff] 0.0
      %39 = vst [vmem:[#allocation2 + $0x28] sm:$0xff] 0.0
    $region21: #{model_classifier_forward.9} parent=1 // pred_fallthru
      _
    %v40 = vld [vmem:[#allocation2] sm:$0xff]
    %v41 = vld [vmem:[#allocation2 + $0x8] sm:$0xff]
    %v42 = vld [vmem:[#allocation2 + $0x10] sm:$0xff]
    %v43 = vld [vmem:[#allocation2 + $0x18] sm:$0xff]
    %v44 = vld [vmem:[#allocation2 + $0x20] sm:$0xff]
    %v45 = vld [vmem:[#allocation2 + $0x28] sm:$0xff]
    %v46 = vld [vmem:[%s0] sm:$0xf]
    %v47 = vld [vmem:[%s0 + $0x4] sm:$0xf]
    %v48 = vld [vmem:[#allocation3] sm:$0xff]
    %v49 = vld [vmem:[#allocation3 + $0x8] sm:$0xf]
    %v50 = vld [vmem:[#allocation3 + $0xc] sm:$0xff]
    %v51 = vld [vmem:[#allocation3 + $0x14] sm:$0xf]
    %v52 = vld [vmem:[#allocation3 + $0x18] sm:$0xff]
    %v53 = vld [vmem:[#allocation3 + $0x20] sm:$0xf]
    %v54 = vld [vmem:[#allocation3 + $0x24] sm:$0xff]
    %v55 = vld [vmem:[#allocation3 + $0x2c] sm:$0xf]
    %v56 = vld [vmem:[#allocation3 + $0x30] sm:$0xff]
    %v57 = vld [vmem:[#allocation3 + $0x38] sm:$0xf]
    %v58 = vld [vmem:[#allocation3 + $0x3c] sm:$0xff]
    %v59 = vld [vmem:[#allocation3 + $0x44] sm:$0xf]
    %v60 = vld [vmem:[#allocation3 + $0x48] sm:$0xff]
    %v61 = vld [vmem:[#allocation3 + $0x50] sm:$0xf]
    %v62 = vld [vmem:[#allocation3 + $0x54] sm:$0xff]
    %v63 = vld [vmem:[#allocation3 + $0x5c] sm:$0xf]
    %v64 = vld [vmem:[#allocation3 + $0x60] sm:$0xff]
    %v65 = vld [vmem:[#allocation3 + $0x68] sm:$0xf]
    %v66 = vld [vmem:[#allocation3 + $0x6c] sm:$0xff]
    %v67 = vld [vmem:[#allocation3 + $0x74] sm:$0xf]
    %v68 = vld [vmem:[#allocation3 + $0x78] sm:$0xff]
    %v69 = vld [vmem:[#allocation3 + $0x80] sm:$0xf]
    %v70 = vld [vmem:[#allocation3 + $0x84] sm:$0xff]
    %v71 = vld [vmem:[#allocation3 + $0x8c] sm:$0xf]
    %v72 = vld [vmem:[#allocation3 + $0x90] sm:$0xff]
    %v73 = vld [vmem:[#allocation3 + $0x98] sm:$0xf]
    %v74 = vld [vmem:[#allocation3 + $0x9c] sm:$0xff]
    %v75 = vld [vmem:[#allocation3 + $0xa4] sm:$0xf]
    %v76 = vld [vmem:[#allocation3 + $0xa8] sm:$0xff]
    %v77 = vld [vmem:[#allocation3 + $0xb0] sm:$0xf]
    %v78 = vld [vmem:[#allocation3 + $0xb4] sm:$0xff]
    %v79 = vld [vmem:[#allocation3 + $0xbc] sm:$0xf]
    %v82 = vunpack.c.l.b16 %v46
    %v83 = vunpack.c.l.b16 %v47
    %v84 = vpack.c.b16 %v83, %v82
    %v118 = vunpack.c.l.b16 %v48
    %v119 = vunpack.c.h.b16 %v48
    %v120 = vunpack.c.l.b16 %v49
    %v121 = vunpack.c.l.b16 %v50
    %v122 = vunpack.c.h.b16 %v50
    %v123 = vunpack.c.l.b16 %v51
    %v124 = vunpack.c.l.b16 %v52
    %v125 = vunpack.c.h.b16 %v52
    %v126 = vunpack.c.l.b16 %v53
    %v127 = vunpack.c.l.b16 %v54
    %v128 = vunpack.c.h.b16 %v54
    %v129 = vunpack.c.l.b16 %v55
    %v130 = vunpack.c.l.b16 %v56
    %v131 = vunpack.c.h.b16 %v56
    %v132 = vunpack.c.l.b16 %v57
    %v133 = vunpack.c.l.b16 %v58
    %v134 = vunpack.c.h.b16 %v58
    %v135 = vunpack.c.l.b16 %v59
    %v136 = vunpack.c.l.b16 %v60
    %v137 = vunpack.c.h.b16 %v60
    %v138 = vunpack.c.l.b16 %v61
    %v139 = vunpack.c.l.b16 %v62
    %v140 = vunpack.c.h.b16 %v62
    %v141 = vunpack.c.l.b16 %v63
    %v142 = vunpack.c.l.b16 %v64
    %v143 = vunpack.c.h.b16 %v64
    %v144 = vunpack.c.l.b16 %v65
    %v145 = vunpack.c.l.b16 %v66
    %v146 = vunpack.c.h.b16 %v66
    %v147 = vunpack.c.l.b16 %v67
    %v148 = vunpack.c.l.b16 %v68
    %v149 = vunpack.c.h.b16 %v68
    %v150 = vunpack.c.l.b16 %v69
    %v151 = vunpack.c.l.b16 %v70
    %v152 = vunpack.c.h.b16 %v70
    %v153 = vunpack.c.l.b16 %v71
    %v154 = vunpack.c.l.b16 %v72
    %v155 = vunpack.c.h.b16 %v72
    %v156 = vunpack.c.l.b16 %v73
    %v157 = vunpack.c.l.b16 %v74
    %v158 = vunpack.c.h.b16 %v74
    %v159 = vunpack.c.l.b16 %v75
    %v160 = vunpack.c.l.b16 %v76
    %v161 = vunpack.c.h.b16 %v76
    %v162 = vunpack.c.l.b16 %v77
    %v163 = vunpack.c.l.b16 %v78
    %v164 = vunpack.c.h.b16 %v78
    %v165 = vunpack.c.l.b16 %v79
    %v166 = vpack.c.b16 %v121, %v118
    %v167 = vpack.c.b16 %v122, %v119
    %v168 = vpack.c.b16 %v123, %v120
    %v169 = vpack.c.b16 %v127, %v124
    %v170 = vpack.c.b16 %v128, %v125
    %v171 = vpack.c.b16 %v129, %v126
    %v172 = vpack.c.b16 %v133, %v130
    %v173 = vpack.c.b16 %v134, %v131
    %v174 = vpack.c.b16 %v135, %v132
    %v175 = vpack.c.b16 %v139, %v136
    %v176 = vpack.c.b16 %v140, %v137
    %v177 = vpack.c.b16 %v141, %v138
    %v178 = vpack.c.b16 %v145, %v142
    %v179 = vpack.c.b16 %v146, %v143
    %v180 = vpack.c.b16 %v147, %v144
    %v181 = vpack.c.b16 %v151, %v148
    %v182 = vpack.c.b16 %v152, %v149
    %v183 = vpack.c.b16 %v153, %v150
    %v184 = vpack.c.b16 %v157, %v154
    %v185 = vpack.c.b16 %v158, %v155
    %v186 = vpack.c.b16 %v159, %v156
    %v187 = vpack.c.b16 %v163, %v160
    %v188 = vpack.c.b16 %v164, %v161
    %v189 = vpack.c.b16 %v165, %v162
    %214 = vmatpush.bf16.msra.mxu0 %v187
    %215 = vmatpush.bf16.msra.mxu0 %v184
    %216 = vmatpush.bf16.msra.mxu0 %v181
    %217 = vmatpush.bf16.msra.mxu0 %v178
    %218 = vmatpush.bf16.msra.mxu0 %v175
    %219 = vmatpush.bf16.msra.mxu0 %v172
    %220 = vmatpush.bf16.msra.mxu0 %v169
    %221 = vmatpush.bf16.msra.mxu0 %v166
    %222 = vmatmul.bf16.gmra.mxu0 %v84
    %v223 = vpop.f32.mrf.mxu0
    %v224 = vadd.f32 0.0, %v223
    %v225 = vpop.f32.mrf.mxu0
    %v226 = vadd.f32 0.0, %v225
    %227 = vdwg.mxu0
    %228 = vmatpush.bf16.msra.mxu0 %v188
    %229 = vmatpush.bf16.msra.mxu0 %v185
    %230 = vmatpush.bf16.msra.mxu0 %v182
    %231 = vmatpush.bf16.msra.mxu0 %v179
    %232 = vmatpush.bf16.msra.mxu0 %v176
    %233 = vmatpush.bf16.msra.mxu0 %v173
    %234 = vmatpush.bf16.msra.mxu0 %v170
    %235 = vmatpush.bf16.msra.mxu0 %v167
    %236 = vmatmul.bf16.gmra.mxu0 %v84
    %v237 = vpop.f32.mrf.mxu0
    %v238 = vadd.f32 0.0, %v237
    %v239 = vpop.f32.mrf.mxu0
    %v240 = vadd.f32 0.0, %v239
    %241 = vdwg.mxu0
    %242 = vmatpush.bf16.msra.mxu0 %v189
    %243 = vmatpush.bf16.msra.mxu0 %v186
    %244 = vmatpush.bf16.msra.mxu0 %v183
    %245 = vmatpush.bf16.msra.mxu0 %v180
    %246 = vmatpush.bf16.msra.mxu0 %v177
    %247 = vmatpush.bf16.msra.mxu0 %v174
    %248 = vmatpush.bf16.msra.mxu0 %v171
    %249 = vmatpush.bf16.msra.mxu0 %v168
    %250 = vmatmul.bf16.gmra.mxu0 %v84
    %v251 = vpop.f32.mrf.mxu0
    %v252 = vadd.f32 0.0, %v251
    %v253 = vpop.f32.mrf.mxu0
    %v254 = vadd.f32 0.0, %v253
    %255 = vdwg.mxu0
    %v256 = vadd.f32 %v40, %v224
    %v257 = vadd.f32 %v41, %v238
    %v258 = vadd.f32 %v42, %v252
    %v259 = vadd.f32 %v43, %v226
    %v260 = vadd.f32 %v44, %v240
    %v261 = vadd.f32 %v45, %v254
    %262 = vst [vmem:[#allocation2] sm:$0xff] %v256
    %263 = vst [vmem:[#allocation2 + $0x8] sm:$0xff] %v257
    %264 = vst [vmem:[#allocation2 + $0x10] sm:$0xff] %v258
    %265 = vst [vmem:[#allocation2 + $0x18] sm:$0xff] %v259
    %266 = vst [vmem:[#allocation2 + $0x20] sm:$0xff] %v260
    %267 = vst [vmem:[#allocation2 + $0x28] sm:$0xff] %v261
    // Predicated region
    $region22: #{model_classifier_forward.9} parent=1 // pred_check
      %p268 = pneg %p30
    $region23: #{model_classifier_forward.9} parent=1 // pred_check_branch
      %270 = sbr.rel (%p268) target = $region25
    $region24: #{model_classifier_forward.9} parent=1 // pred_region
      %v271 = vld [vmem:[#allocation2] sm:$0xff]
      %v272 = vld [vmem:[#allocation2 + $0x8] sm:$0xff]
      %v273 = vld [vmem:[#allocation2 + $0x10] sm:$0xff]
      %v274 = vld [vmem:[#allocation2 + $0x18] sm:$0xff]
      %v275 = vld [vmem:[#allocation2 + $0x20] sm:$0xff]
      %v276 = vld [vmem:[#allocation2 + $0x28] sm:$0xff]
      %v277 = vld [vmem:[%s2] sm:$0x7]
      %v279 = vperm.slane %v277, 0
      %v280 = vperm.slane %v277, 1
      %v281 = vperm.slane %v277, 2
      %v285 = vadd.f32 %v271, %v279
      %v286 = vadd.f32 %v272, %v280
      %v287 = vadd.f32 %v273, %v281
      %v288 = vadd.f32 %v274, %v279
      %v289 = vadd.f32 %v275, %v280
      %v290 = vadd.f32 %v276, %v281
      %v291 = vpack.c.bf16 %v286, %v285
      %v292 = vpack.c.bf16 %v287, %v287
      %v293 = vpack.c.bf16 %v289, %v288
      %v294 = vpack.c.bf16 %v290, %v290
      %295 = vst [vmem:[%s3] sm:$0xff] %v291
      %296 = vst [vmem:[%s3 + $0x8] sm:$0xf] %v292
      %297 = vst [vmem:[%s3 + $0xc] sm:$0xff] %v293
      %298 = vst [vmem:[%s3 + $0x14] sm:$0xf] %v294
    $region25: #{model_classifier_forward.9} parent=1 // pred_fallthru
      _
    // Predicated region
    $region26: #{model_classifier_forward.9} parent=1 // pred_check
      _
    $region27: #{model_classifier_forward.9} parent=1 // pred_check_branch
      %300 = sbr.rel (0) target = $region29
    $region28: #{model_classifier_forward.9} parent=1 // pred_region
      _
    $region29: #{model_classifier_forward.9} parent=1 // pred_fallthru
      _
    // Predicated region
    $region30: #{model_classifier_forward.9} parent=1 // pred_check
      _
    $region31: #{model_classifier_forward.9} parent=1 // pred_check_branch
      %302 = sbr.rel (0) target = $region33
    $region32: #{model_classifier_forward.9} parent=1 // pred_region
      _
    $region33: #{model_classifier_forward.9} parent=1 // pred_fallthru
      _
    %303 = vsyncpa [#allocation4], 1

// kernel: model_classifier_forward.12
$region0: #{model_classifier_forward.12}
  #allocation0 [shape = 'u32[]', space=smem, size = 0x4, offset = 0x4, fixed_abs, tag = 'smem constant byte address 0x4 - core index']
  #allocation1 [shape = 'u32[72,128]{1,0:T(1,128)}', space=vmem, size = 0x9000, scoped, tag = 'internal scratch']
  #allocation2 [shape = 'f32[16,128]{1,0:T(8,128)}', space=vmem, size = 0x2000, scoped, tag = 'scratch operand']
  %s0 = inlined_call_operand.vmem [shape: bf16[16,128], index: 0, kind: input, shape index: {}, may-alias: {0,5}]
  %s1 = inlined_call_operand.hbm [shape: bf16[128,512], index: 1, kind: input, shape index: {}]
  %s2 = inlined_call_operand.vmem [shape: f32[1,512], index: 2, kind: input, shape index: {}]
  %s3 = inlined_call_operand.hbm [shape: bf16[512,128], index: 3, kind: input, shape index: {}]
  %s4 = inlined_call_operand.vmem [shape: f32[1,128], index: 4, kind: input, shape index: {}]
  %s5 = inlined_call_operand.vmem [shape: bf16[16,128], index: 5, kind: input, shape index: {}, may-alias: {0,5}]
  %s6 = inlined_call_operand.vmem [shape: f32[1,128], index: 6, kind: input, shape index: {}]
  %s7 = inlined_call_operand.vmem [shape: f32[1,128], index: 7, kind: input, shape index: {}]
  %s8 = inlined_call_operand.vmem [shape: bf16[16,128], index: 8, kind: output, shape index: {}]
  %s9 = sld [smem:[#allocation0]]
  $region58: #{model_classifier_forward.12} parent=0
    _
  %s11 = ssub.s32 1, %s9
  %s12 = scalar_select 0, %s11, %s9
  $region1: #{model_classifier_forward.12} parent=0
    #allocation3 [shape = 'u8[131072]{0}', space=vmem, size = 0x20000, scoped, tag = 'input window, operand 1, single buffered']
    #allocation4 [shape = 's32[1]{0}', space=sflag, size = 0x4, scoped, tag = 'scoped memory for model_classifier_forward.12']
    #allocation5 [shape = 'u8[131072]{0}', space=vmem, size = 0x20000, scoped, tag = 'input window, operand 3, single buffered']
    #allocation6 [shape = 's32[1]{0}', space=sflag, size = 0x4, scoped, tag = 'scoped memory for model_classifier_forward.12']
    %13 = vsyncpa [#allocation4], 0
    %14 = vsyncpa [#allocation6], 0
    // Predicated region
    $region2: #{model_classifier_forward.12} parent=1 // pred_check
      _
    $region3: #{model_classifier_forward.12} parent=1 // pred_check_branch
      %16 = sbr.rel (0) target = $region5
    $region4: #{model_classifier_forward.12} parent=1 // pred_region
      _
    $region5: #{model_classifier_forward.12} parent=1 // pred_fallthru
      _
    // Predicated region
    $region6: #{model_classifier_forward.12} parent=1 // pred_check
      _
    $region7: #{model_classifier_forward.12} parent=1 // pred_check_branch
      %18 = sbr.rel (0) target = $region9
    $region8: #{model_classifier_forward.12} parent=1 // pred_region
      %20 = vsyncadd [#allocation4], 0
      %s21 = sshll.u32 %s1, 4
      %s22 = int_to_ptr.hbm [resolvable:$true] %s21
      %s23 = sshll.u32 [#allocation3], 4
      %s24 = int_to_ptr.vmem [resolvable:$true] %s23
      %29 = dma.hbm_to_vmem [thread:$0]  %s22, 4096, %s24, [#allocation4], 256, 256, 16
    $region9: #{model_classifier_forward.12} parent=1 // pred_fallthru
      _
    // Predicated region
    $region10: #{model_classifier_forward.12} parent=1 // pred_check
      _
    $region11: #{model_classifier_forward.12} parent=1 // pred_check_branch
      %31 = sbr.rel (0) target = $region13
    $region12: #{model_classifier_forward.12} parent=1 // pred_region
      _
    $region13: #{model_classifier_forward.12} parent=1 // pred_fallthru
      _
    // Predicated region
    $region14: #{model_classifier_forward.12} parent=1 // pred_check
      _
    $region15: #{model_classifier_forward.12} parent=1 // pred_check_branch
      %33 = sbr.rel (0) target = $region17
    $region16: #{model_classifier_forward.12} parent=1 // pred_region
      %35 = vsyncadd [#allocation6], 0
      %s36 = sshll.u32 %s3, 4
      %s37 = int_to_ptr.hbm [resolvable:$true] %s36
      %s38 = sshll.u32 [#allocation5], 4
      %s39 = int_to_ptr.vmem [resolvable:$true] %s38
      %44 = dma.hbm_to_vmem [thread:$0]  %s37, 4096, %s39, [#allocation6], 64, 64, 4
    $region17: #{model_classifier_forward.12} parent=1 // pred_fallthru
      _
    // Predicated region
    $region18: #{model_classifier_forward.12} parent=1 // pred_check
      _
    $region19: #{model_classifier_forward.12} parent=1 // pred_check_branch
      %46 = sbr.rel (0) target = $region21
    $region20: #{model_classifier_forward.12} parent=1 // pred_region
      _
    $region21: #{model_classifier_forward.12} parent=1 // pred_fallthru
      _
    // Predicated region
    $region22: #{model_classifier_forward.12} parent=1 // pred_check
      _
    $region23: #{model_classifier_forward.12} parent=1 // pred_check_branch
      %48 = sbr.rel (0) target = $region25
    $region24: #{model_classifier_forward.12} parent=1 // pred_region
      _
    $region25: #{model_classifier_forward.12} parent=1 // pred_fallthru
      _
    // Predicated region
    $region26: #{model_classifier_forward.12} parent=1 // pred_check
      _
    $region27: #{model_classifier_forward.12} parent=1 // pred_check_branch
      %50 = sbr.rel (0) target = $region29
    $region28: #{model_classifier_forward.12} parent=1 // pred_region
      _
    $region29: #{model_classifier_forward.12} parent=1 // pred_fallthru
      _
    // Predicated region
    $region30: #{model_classifier_forward.12} parent=1 // pred_check
      _
    $region31: #{model_classifier_forward.12} parent=1 // pred_check_branch
      %52 = sbr.rel (0) target = $region33
    $region32: #{model_classifier_forward.12} parent=1 // pred_region
      _
    $region33: #{model_classifier_forward.12} parent=1 // pred_fallthru
      _
    // Predicated region
    $region34: #{model_classifier_forward.12} parent=1 // pred_check
      _
    $region35: #{model_classifier_forward.12} parent=1 // pred_check_branch
      %54 = sbr.rel (0) target = $region37
    $region36: #{model_classifier_forward.12} parent=1 // pred_region
      %56 = dma.done [#allocation4], 4096
    $region37: #{model_classifier_forward.12} parent=1 // pred_fallthru
      _
    // Predicated region
    $region38: #{model_classifier_forward.12} parent=1 // pred_check
      _
    $region39: #{model_classifier_forward.12} parent=1 // pred_check_branch
      %58 = sbr.rel (0) target = $region41
    $region40: #{model_classifier_forward.12} parent=1 // pred_region
      %60 = dma.done [#allocation6], 4096
    $region41: #{model_classifier_forward.12} parent=1 // pred_fallthru
      _
    %p61 = scmp.eq.s32.totalorder 0, 0
    // Predicated region
    $region42: #{model_classifier_forward.12} parent=1 // pred_check
      %p62 = pneg %p61
    $region43: #{model_classifier_forward.12} parent=1 // pred_check_branch
      %64 = sbr.rel (%p62) target = $region45
    $region44: #{model_classifier_forward.12} parent=1 // pred_region
      %65 = vst [vmem:[#allocation2] sm:$0xff] 0.0
      %66 = vst [vmem:[#allocation2 + $0x8] sm:$0xff] 0.0
    $region45: #{model_classifier_forward.12} parent=1 // pred_fallthru
      _
    %v67 = vld [vmem:[%s0] sm:$0xf]
    %v68 = vld [vmem:[%s0 + $0x4] sm:$0xf]
    %v69 = vld [vmem:[#allocation3] sm:$0xff]
    %v70 = vld [vmem:[#allocation3 + $0x8] sm:$0xff]
    %v71 = vld [vmem:[#allocation3 + $0x10] sm:$0xff]
    %v72 = vld [vmem:[#allocation3 + $0x18] sm:$0xff]
    %v73 = vld [vmem:[#allocation3 + $0x20] sm:$0xff]
    %v74 = vld [vmem:[#allocation3 + $0x28] sm:$0xff]
    %v75 = vld [vmem:[#allocation3 + $0x30] sm:$0xff]
    %v76 = vld [vmem:[#allocation3 + $0x38] sm:$0xff]
    %v77 = vld [vmem:[#allocation3 + $0x40] sm:$0xff]
    %v78 = vld [vmem:[#allocation3 + $0x48] sm:$0xff]
    %v79 = vld [vmem:[#allocation3 + $0x50] sm:$0xff]
    %v80 = vld [vmem:[#allocation3 + $0x58] sm:$0xff]
    %v81 = vld [vmem:[#allocation3 + $0x60] sm:$0xff]
    %v82 = vld [vmem:[#allocation3 + $0x68] sm:$0xff]
    %v83 = vld [vmem:[#allocation3 + $0x70] sm:$0xff]
    %v84 = vld [vmem:[#allocation3 + $0x78] sm:$0xff]
    %v85 = vld [vmem:[#allocation3 + $0x80] sm:$0xff]
    %v86 = vld [vmem:[#allocation3 + $0x88] sm:$0xff]
    %v87 = vld [vmem:[#allocation3 + $0x90] sm:$0xff]
    %v88 = vld [vmem:[#allocation3 + $0x98] sm:$0xff]
    %v89 = vld [vmem:[#allocation3 + $0xa0] sm:$0xff]
    %v90 = vld [vmem:[#allocation3 + $0xa8] sm:$0xff]
    %v91 = vld [vmem:[#allocation3 + $0xb0] sm:$0xff]
    %v92 = vld [vmem:[#allocation3 + $0xb8] sm:$0xff]
    %v93 = vld [vmem:[#allocation3 + $0xc0] sm:$0xff]
    %v94 = vld [vmem:[#allocation3 + $0xc8] sm:$0xff]
    %v95 = vld [vmem:[#allocation3 + $0xd0] sm:$0xff]
    %v96 = vld [vmem:[#allocation3 + $0xd8] sm:$0xff]
    %v97 = vld [vmem:[#allocation3 + $0xe0] sm:$0xff]
    %v98 = vld [vmem:[#allocation3 + $0xe8] sm:$0xff]
    %v99 = vld [vmem:[#allocation3 + $0xf0] sm:$0xff]
    %v100 = vld [vmem:[#allocation3 + $0xf8] sm:$0xff]
    %v101 = vld [vmem:[%s2] sm:$0xf]
    %v103 = vperm.slane %v101, 0
    %v104 = vperm.slane %v101, 1
    %v105 = vperm.slane %v101, 2
    %v106 = vperm.slane %v101, 3
    %v113 = vunpack.c.l.b16 %v67
    %v114 = vunpack.c.l.b16 %v68
    %v115 = vpack.c.b16 %v114, %v113
    %v149 = vunpack.c.l.b16 %v69
    %v150 = vunpack.c.h.b16 %v69
    %v151 = vunpack.c.l.b16 %v70
    %v152 = vunpack.c.h.b16 %v70
    %v153 = vunpack.c.l.b16 %v71
    %v154 = vunpack.c.h.b16 %v71
    %v155 = vunpack.c.l.b16 %v72
    %v156 = vunpack.c.h.b16 %v72
    %v157 = vunpack.c.l.b16 %v73
    %v158 = vunpack.c.h.b16 %v73
    %v159 = vunpack.c.l.b16 %v74
    %v160 = vunpack.c.h.b16 %v74
    %v161 = vunpack.c.l.b16 %v75
    %v162 = vunpack.c.h.b16 %v75
    %v163 = vunpack.c.l.b16 %v76
    %v164 = vunpack.c.h.b16 %v76
    %v165 = vunpack.c.l.b16 %v77
    %v166 = vunpack.c.h.b16 %v77
    %v167 = vunpack.c.l.b16 %v78
    %v168 = vunpack.c.h.b16 %v78
    %v169 = vunpack.c.l.b16 %v79
    %v170 = vunpack.c.h.b16 %v79
    %v171 = vunpack.c.l.b16 %v80
    %v172 = vunpack.c.h.b16 %v80
    %v173 = vunpack.c.l.b16 %v81
    %v174 = vunpack.c.h.b16 %v81
    %v175 = vunpack.c.l.b16 %v82
    %v176 = vunpack.c.h.b16 %v82
    %v177 = vunpack.c.l.b16 %v83
    %v178 = vunpack.c.h.b16 %v83
    %v179 = vunpack.c.l.b16 %v84
    %v180 = vunpack.c.h.b16 %v84
    %v181 = vunpack.c.l.b16 %v85
    %v182 = vunpack.c.h.b16 %v85
    %v183 = vunpack.c.l.b16 %v86
    %v184 = vunpack.c.h.b16 %v86
    %v185 = vunpack.c.l.b16 %v87
    %v186 = vunpack.c.h.b16 %v87
    %v187 = vunpack.c.l.b16 %v88
    %v188 = vunpack.c.h.b16 %v88
    %v189 = vunpack.c.l.b16 %v89
    %v190 = vunpack.c.h.b16 %v89
    %v191 = vunpack.c.l.b16 %v90
    %v192 = vunpack.c.h.b16 %v90
    %v193 = vunpack.c.l.b16 %v91
    %v194 = vunpack.c.h.b16 %v91
    %v195 = vunpack.c.l.b16 %v92
    %v196 = vunpack.c.h.b16 %v92
    %v197 = vunpack.c.l.b16 %v93
    %v198 = vunpack.c.h.b16 %v93
    %v199 = vunpack.c.l.b16 %v94
    %v200 = vunpack.c.h.b16 %v94
    %v201 = vunpack.c.l.b16 %v95
    %v202 = vunpack.c.h.b16 %v95
    %v203 = vunpack.c.l.b16 %v96
    %v204 = vunpack.c.h.b16 %v96
    %v205 = vunpack.c.l.b16 %v97
    %v206 = vunpack.c.h.b16 %v97
    %v207 = vunpack.c.l.b16 %v98
    %v208 = vunpack.c.h.b16 %v98
    %v209 = vunpack.c.l.b16 %v99
    %v210 = vunpack.c.h.b16 %v99
    %v211 = vunpack.c.l.b16 %v100
    %v212 = vunpack.c.h.b16 %v100
    %v213 = vpack.c.b16 %v153, %v149
    %v214 = vpack.c.b16 %v154, %v150
    %v215 = vpack.c.b16 %v155, %v151
    %v216 = vpack.c.b16 %v156, %v152
    %v217 = vpack.c.b16 %v161, %v157
    %v218 = vpack.c.b16 %v162, %v158
    %v219 = vpack.c.b16 %v163, %v159
    %v220 = vpack.c.b16 %v164, %v160
    %v221 = vpack.c.b16 %v169, %v165
    %v222 = vpack.c.b16 %v170, %v166
    %v223 = vpack.c.b16 %v171, %v167
    %v224 = vpack.c.b16 %v172, %v168
    %v225 = vpack.c.b16 %v177, %v173
    %v226 = vpack.c.b16 %v178, %v174
    %v227 = vpack.c.b16 %v179, %v175
    %v228 = vpack.c.b16 %v180, %v176
    %v229 = vpack.c.b16 %v185, %v181
    %v230 = vpack.c.b16 %v186, %v182
    %v231 = vpack.c.b16 %v187, %v183
    %v232 = vpack.c.b16 %v188, %v184
    %v233 = vpack.c.b16 %v193, %v189
    %v234 = vpack.c.b16 %v194, %v190
    %v235 = vpack.c.b16 %v195, %v191
    %v236 = vpack.c.b16 %v196, %v192
    %v237 = vpack.c.b16 %v201, %v197
    %v238 = vpack.c.b16 %v202, %v198
    %v239 = vpack.c.b16 %v203, %v199
    %v240 = vpack.c.b16 %v204, %v200
    %v241 = vpack.c.b16 %v209, %v205
    %v242 = vpack.c.b16 %v210, %v206
    %v243 = vpack.c.b16 %v211, %v207
    %v244 = vpack.c.b16 %v212, %v208
    %277 = vmatpush.bf16.msra.mxu0 %v241
    %278 = vmatpush.bf16.msra.mxu0 %v237
    %279 = vmatpush.bf16.msra.mxu0 %v233
    %280 = vmatpush.bf16.msra.mxu0 %v229
    %281 = vmatpush.bf16.msra.mxu0 %v225
    %282 = vmatpush.bf16.msra.mxu0 %v221
    %283 = vmatpush.bf16.msra.mxu0 %v217
    %284 = vmatpush.bf16.msra.mxu0 %v213
    %285 = vmatmul.bf16.gmra.mxu0 %v115
    %v286 = vpop.f32.mrf.mxu0
    %v287 = vadd.f32 %v103, %v286
    %v288 = vpop.f32.mrf.mxu0
    %v289 = vadd.f32 %v103, %v288
    %290 = vdwg.mxu0
    %291 = vmatpush.bf16.msra.mxu0 %v242
    %292 = vmatpush.bf16.msra.mxu0 %v238
    %293 = vmatpush.bf16.msra.mxu0 %v234
    %294 = vmatpush.bf16.msra.mxu0 %v230
    %295 = vmatpush.bf16.msra.mxu0 %v226
    %296 = vmatpush.bf16.msra.mxu0 %v222
    %297 = vmatpush.bf16.msra.mxu0 %v218
    %298 = vmatpush.bf16.msra.mxu0 %v214
    %299 = vmatmul.bf16.gmra.mxu0 %v115
    %v300 = vpop.f32.mrf.mxu0
    %v301 = vadd.f32 %v104, %v300
    %v302 = vpop.f32.mrf.mxu0
    %v303 = vadd.f32 %v104, %v302
    %304 = vdwg.mxu0
    %305 = vmatpush.bf16.msra.mxu0 %v243
    %306 = vmatpush.bf16.msra.mxu0 %v239
    %307 = vmatpush.bf16.msra.mxu0 %v235
    %308 = vmatpush.bf16.msra.mxu0 %v231
    %309 = vmatpush.bf16.msra.mxu0 %v227
    %310 = vmatpush.bf16.msra.mxu0 %v223
    %311 = vmatpush.bf16.msra.mxu0 %v219
    %312 = vmatpush.bf16.msra.mxu0 %v215
    %313 = vmatmul.bf16.gmra.mxu0 %v115
    %v314 = vpop.f32.mrf.mxu0
    %v315 = vadd.f32 %v105, %v314
    %v316 = vpop.f32.mrf.mxu0
    %v317 = vadd.f32 %v105, %v316
    %318 = vdwg.mxu0
    %319 = vmatpush.bf16.msra.mxu0 %v244
    %320 = vmatpush.bf16.msra.mxu0 %v240
    %321 = vmatpush.bf16.msra.mxu0 %v236
    %322 = vmatpush.bf16.msra.mxu0 %v232
    %323 = vmatpush.bf16.msra.mxu0 %v228
    %324 = vmatpush.bf16.msra.mxu0 %v224
    %325 = vmatpush.bf16.msra.mxu0 %v220
    %326 = vmatpush.bf16.msra.mxu0 %v216
    %327 = vmatmul.bf16.gmra.mxu0 %v115
    %v328 = vpop.f32.mrf.mxu0
    %v329 = vadd.f32 %v106, %v328
    %v330 = vpop.f32.mrf.mxu0
    %v331 = vadd.f32 %v106, %v330
    %332 = vdwg.mxu0
    %v333 = vmul.f32 %v287, %v287
    %v334 = vmul.f32 %v301, %v301
    %v335 = vmul.f32 %v315, %v315
    %v336 = vmul.f32 %v329, %v329
    %v337 = vmul.f32 %v289, %v289
    %v338 = vmul.f32 %v303, %v303
    %v339 = vmul.f32 %v317, %v317
    %v340 = vmul.f32 %v331, %v331
    %v341 = vmul.f32 %v287, %v333
    %v342 = vmul.f32 %v301, %v334
    %v343 = vmul.f32 %v315, %v335
    %v344 = vmul.f32 %v329, %v336
    %v345 = vmul.f32 %v289, %v337
    %v346 = vmul.f32 %v303, %v338
    %v347 = vmul.f32 %v317, %v339
    %v348 = vmul.f32 %v331, %v340
    %v349 = vmul.f32 %v341, 0.044715
    %v350 = vmul.f32 %v342, 0.044715
    %v351 = vmul.f32 %v343, 0.044715
    %v352 = vmul.f32 %v344, 0.044715
    %v353 = vmul.f32 %v345, 0.044715
    %v354 = vmul.f32 %v346, 0.044715
    %v355 = vmul.f32 %v347, 0.044715
    %v356 = vmul.f32 %v348, 0.044715
    %v357 = vadd.f32 %v287, %v349
    %v358 = vadd.f32 %v301, %v350
    %v359 = vadd.f32 %v315, %v351
    %v360 = vadd.f32 %v329, %v352
    %v361 = vadd.f32 %v289, %v353
    %v362 = vadd.f32 %v303, %v354
    %v363 = vadd.f32 %v317, %v355
    %v364 = vadd.f32 %v331, %v356
    %v365 = vmul.f32 %v357, 0.7978846
    %v366 = vmul.f32 %v358, 0.7978846
    %v367 = vmul.f32 %v359, 0.7978846
    %v368 = vmul.f32 %v360, 0.7978846
    %v369 = vmul.f32 %v361, 0.7978846
    %v370 = vmul.f32 %v362, 0.7978846
    %v371 = vmul.f32 %v363, 0.7978846
    %v372 = vmul.f32 %v364, 0.7978846
    %v373 = vtanh.pop %v365
    %v374 = vtanh.pop %v366
    %v375 = vtanh.pop %v367
    %v376 = vtanh.pop %v368
    %v377 = vtanh.pop %v369
    %v378 = vtanh.pop %v370
    %v379 = vtanh.pop %v371
    %v380 = vtanh.pop %v372
    %v381 = vadd.f32 %v373, 1.0
    %v382 = vadd.f32 %v374, 1.0
    %v383 = vadd.f32 %v375, 1.0
    %v384 = vadd.f32 %v376, 1.0
    %v385 = vadd.f32 %v377, 1.0
    %v386 = vadd.f32 %v378, 1.0
    %v387 = vadd.f32 %v379, 1.0
    %v388 = vadd.f32 %v380, 1.0
    %v389 = vmul.f32 %v381, 0.5
    %v390 = vmul.f32 %v382, 0.5
    %v391 = vmul.f32 %v383, 0.5
    %v392 = vmul.f32 %v384, 0.5
    %v393 = vmul.f32 %v385, 0.5
    %v394 = vmul.f32 %v386, 0.5
    %v395 = vmul.f32 %v387, 0.5
    %v396 = vmul.f32 %v388, 0.5
    %v397 = vmul.f32 %v287, %v389
    %v398 = vmul.f32 %v301, %v390
    %v399 = vmul.f32 %v315, %v391
    %v400 = vmul.f32 %v329, %v392
    %v401 = vmul.f32 %v289, %v393
    %v402 = vmul.f32 %v303, %v394
    %v403 = vmul.f32 %v317, %v395
    %v404 = vmul.f32 %v331, %v396
    %v405 = vld [vmem:[#allocation2] sm:$0xff]
    %v406 = vld [vmem:[#allocation2 + $0x8] sm:$0xff]
    %v407 = vpack.c.bf16 %v401, %v397
    %v408 = vpack.c.bf16 %v402, %v398
    %v409 = vpack.c.bf16 %v403, %v399
    %v410 = vpack.c.bf16 %v404, %v400
    %v411 = vld [vmem:[#allocation5] sm:$0xf]
    %v412 = vld [vmem:[#allocation5 + $0x4] sm:$0xf]
    %v413 = vld [vmem:[#allocation5 + $0x8] sm:$0xf]
    %v414 = vld [vmem:[#allocation5 + $0xc] sm:$0xf]
    %v415 = vld [vmem:[#allocation5 + $0x10] sm:$0xf]
    %v416 = vld [vmem:[#allocation5 + $0x14] sm:$0xf]
    %v417 = vld [vmem:[#allocation5 + $0x18] sm:$0xf]
    %v418 = vld [vmem:[#allocation5 + $0x1c] sm:$0xf]
    %v419 = vld [vmem:[#allocation5 + $0x20] sm:$0xf]
    %v420 = vld [vmem:[#allocation5 + $0x24] sm:$0xf]
    %v421 = vld [vmem:[#allocation5 + $0x28] sm:$0xf]
    %v422 = vld [vmem:[#allocation5 + $0x2c] sm:$0xf]
    %v423 = vld [vmem:[#allocation5 + $0x30] sm:$0xf]
    %v424 = vld [vmem:[#allocation5 + $0x34] sm:$0xf]
    %v425 = vld [vmem:[#allocation5 + $0x38] sm:$0xf]
    %v426 = vld [vmem:[#allocation5 + $0x3c] sm:$0xf]
    %v427 = vld [vmem:[#allocation5 + $0x40] sm:$0xf]
    %v428 = vld [vmem:[#allocation5 + $0x44] sm:$0xf]
    %v429 = vld [vmem:[#allocation5 + $0x48] sm:$0xf]
    %v430 = vld [vmem:[#allocation5 + $0x4c] sm:$0xf]
    %v431 = vld [vmem:[#allocation5 + $0x50] sm:$0xf]
    %v432 = vld [vmem:[#allocation5 + $0x54] sm:$0xf]
    %v433 = vld [vmem:[#allocation5 + $0x58] sm:$0xf]
    %v434 = vld [vmem:[#allocation5 + $0x5c] sm:$0xf]
    %v435 = vld [vmem:[#allocation5 + $0x60] sm:$0xf]
    %v436 = vld [vmem:[#allocation5 + $0x64] sm:$0xf]
    %v437 = vld [vmem:[#allocation5 + $0x68] sm:$0xf]
    %v438 = vld [vmem:[#allocation5 + $0x6c] sm:$0xf]
    %v439 = vld [vmem:[#allocation5 + $0x70] sm:$0xf]
    %v440 = vld [vmem:[#allocation5 + $0x74] sm:$0xf]
    %v441 = vld [vmem:[#allocation5 + $0x78] sm:$0xf]
    %v442 = vld [vmem:[#allocation5 + $0x7c] sm:$0xf]
    %v443 = vld [vmem:[#allocation5 + $0x80] sm:$0xf]
    %v444 = vld [vmem:[#allocation5 + $0x84] sm:$0xf]
    %v445 = vld [vmem:[#allocation5 + $0x88] sm:$0xf]
    %v446 = vld [vmem:[#allocation5 + $0x8c] sm:$0xf]
    %v447 = vld [vmem:[#allocation5 + $0x90] sm:$0xf]
    %v448 = vld [vmem:[#allocation5 + $0x94] sm:$0xf]
    %v449 = vld [vmem:[#allocation5 + $0x98] sm:$0xf]
    %v450 = vld [vmem:[#allocation5 + $0x9c] sm:$0xf]
    %v451 = vld [vmem:[#allocation5 + $0xa0] sm:$0xf]
    %v452 = vld [vmem:[#allocation5 + $0xa4] sm:$0xf]
    %v453 = vld [vmem:[#allocation5 + $0xa8] sm:$0xf]
    %v454 = vld [vmem:[#allocation5 + $0xac] sm:$0xf]
    %v455 = vld [vmem:[#allocation5 + $0xb0] sm:$0xf]
    %v456 = vld [vmem:[#allocation5 + $0xb4] sm:$0xf]
    %v457 = vld [vmem:[#allocation5 + $0xb8] sm:$0xf]
    %v458 = vld [vmem:[#allocation5 + $0xbc] sm:$0xf]
    %v459 = vld [vmem:[#allocation5 + $0xc0] sm:$0xf]
    %v460 = vld [vmem:[#allocation5 + $0xc4] sm:$0xf]
    %v461 = vld [vmem:[#allocation5 + $0xc8] sm:$0xf]
    %v462 = vld [vmem:[#allocation5 + $0xcc] sm:$0xf]
    %v463 = vld [vmem:[#allocation5 + $0xd0] sm:$0xf]
    %v464 = vld [vmem:[#allocation5 + $0xd4] sm:$0xf]
    %v465 = vld [vmem:[#allocation5 + $0xd8] sm:$0xf]
    %v466 = vld [vmem:[#allocation5 + $0xdc] sm:$0xf]
    %v467 = vld [vmem:[#allocation5 + $0xe0] sm:$0xf]
    %v468 = vld [vmem:[#allocation5 + $0xe4] sm:$0xf]
    %v469 = vld [vmem:[#allocation5 + $0xe8] sm:$0xf]
    %v470 = vld [vmem:[#allocation5 + $0xec] sm:$0xf]
    %v471 = vld [vmem:[#allocation5 + $0xf0] sm:$0xf]
    %v472 = vld [vmem:[#allocation5 + $0xf4] sm:$0xf]
    %v473 = vld [vmem:[#allocation5 + $0xf8] sm:$0xf]
    %v474 = vld [vmem:[#allocation5 + $0xfc] sm:$0xf]
    %v539 = vunpack.c.l.b16 %v411
    %v540 = vunpack.c.l.b16 %v412
    %v541 = vunpack.c.l.b16 %v413
    %v542 = vunpack.c.l.b16 %v414
    %v543 = vunpack.c.l.b16 %v415
    %v544 = vunpack.c.l.b16 %v416
    %v545 = vunpack.c.l.b16 %v417
    %v546 = vunpack.c.l.b16 %v418
    %v547 = vunpack.c.l.b16 %v419
    %v548 = vunpack.c.l.b16 %v420
    %v549 = vunpack.c.l.b16 %v421
    %v550 = vunpack.c.l.b16 %v422
    %v551 = vunpack.c.l.b16 %v423
    %v552 = vunpack.c.l.b16 %v424
    %v553 = vunpack.c.l.b16 %v425
    %v554 = vunpack.c.l.b16 %v426
    %v555 = vunpack.c.l.b16 %v427
    %v556 = vunpack.c.l.b16 %v428
    %v557 = vunpack.c.l.b16 %v429
    %v558 = vunpack.c.l.b16 %v430
    %v559 = vunpack.c.l.b16 %v431
    %v560 = vunpack.c.l.b16 %v432
    %v561 = vunpack.c.l.b16 %v433
    %v562 = vunpack.c.l.b16 %v434
    %v563 = vunpack.c.l.b16 %v435
    %v564 = vunpack.c.l.b16 %v436
    %v565 = vunpack.c.l.b16 %v437
    %v566 = vunpack.c.l.b16 %v438
    %v567 = vunpack.c.l.b16 %v439
    %v568 = vunpack.c.l.b16 %v440
    %v569 = vunpack.c.l.b16 %v441
    %v570 = vunpack.c.l.b16 %v442
    %v571 = vunpack.c.l.b16 %v443
    %v572 = vunpack.c.l.b16 %v444
    %v573 = vunpack.c.l.b16 %v445
    %v574 = vunpack.c.l.b16 %v446
    %v575 = vunpack.c.l.b16 %v447
    %v576 = vunpack.c.l.b16 %v448
    %v577 = vunpack.c.l.b16 %v449
    %v578 = vunpack.c.l.b16 %v450
    %v579 = vunpack.c.l.b16 %v451
    %v580 = vunpack.c.l.b16 %v452
    %v581 = vunpack.c.l.b16 %v453
    %v582 = vunpack.c.l.b16 %v454
    %v583 = vunpack.c.l.b16 %v455
    %v584 = vunpack.c.l.b16 %v456
    %v585 = vunpack.c.l.b16 %v457
    %v586 = vunpack.c.l.b16 %v458
    %v587 = vunpack.c.l.b16 %v459
    %v588 = vunpack.c.l.b16 %v460
    %v589 = vunpack.c.l.b16 %v461
    %v590 = vunpack.c.l.b16 %v462
    %v591 = vunpack.c.l.b16 %v463
    %v592 = vunpack.c.l.b16 %v464
    %v593 = vunpack.c.l.b16 %v465
    %v594 = vunpack.c.l.b16 %v466
    %v595 = vunpack.c.l.b16 %v467
    %v596 = vunpack.c.l.b16 %v468
    %v597 = vunpack.c.l.b16 %v469
    %v598 = vunpack.c.l.b16 %v470
    %v599 = vunpack.c.l.b16 %v471
    %v600 = vunpack.c.l.b16 %v472
    %v601 = vunpack.c.l.b16 %v473
    %v602 = vunpack.c.l.b16 %v474
    %v603 = vpack.c.b16 %v540, %v539
    %v604 = vpack.c.b16 %v542, %v541
    %v605 = vpack.c.b16 %v544, %v543
    %v606 = vpack.c.b16 %v546, %v545
    %v607 = vpack.c.b16 %v548, %v547
    %v608 = vpack.c.b16 %v550, %v549
    %v609 = vpack.c.b16 %v552, %v551
    %v610 = vpack.c.b16 %v554, %v553
    %v611 = vpack.c.b16 %v556, %v555
    %v612 = vpack.c.b16 %v558, %v557
    %v613 = vpack.c.b16 %v560, %v559
    %v614 = vpack.c.b16 %v562, %v561
    %v615 = vpack.c.b16 %v564, %v563
    %v616 = vpack.c.b16 %v566, %v565
    %v617 = vpack.c.b16 %v568, %v567
    %v618 = vpack.c.b16 %v570, %v569
    %v619 = vpack.c.b16 %v572, %v571
    %v620 = vpack.c.b16 %v574, %v573
    %v621 = vpack.c.b16 %v576, %v575
    %v622 = vpack.c.b16 %v578, %v577
    %v623 = vpack.c.b16 %v580, %v579
    %v624 = vpack.c.b16 %v582, %v581
    %v625 = vpack.c.b16 %v584, %v583
    %v626 = vpack.c.b16 %v586, %v585
    %v627 = vpack.c.b16 %v588, %v587
    %v628 = vpack.c.b16 %v590, %v589
    %v629 = vpack.c.b16 %v592, %v591
    %v630 = vpack.c.b16 %v594, %v593
    %v631 = vpack.c.b16 %v596, %v595
    %v632 = vpack.c.b16 %v598, %v597
    %v633 = vpack.c.b16 %v600, %v599
    %v634 = vpack.c.b16 %v602, %v601
    %667 = vmatpush.bf16.msra.mxu0 %v610
    %668 = vmatpush.bf16.msra.mxu0 %v609
    %669 = vmatpush.bf16.msra.mxu0 %v608
    %670 = vmatpush.bf16.msra.mxu0 %v607
    %671 = vmatpush.bf16.msra.mxu0 %v606
    %672 = vmatpush.bf16.msra.mxu0 %v605
    %673 = vmatpush.bf16.msra.mxu0 %v604
    %674 = vmatpush.bf16.msra.mxu0 %v603
    %675 = vmatmul.bf16.gmra.mxu0 %v407
    %v676 = vpop.f32.mrf.mxu0
    %v677 = vadd.f32 0.0, %v676
    %v678 = vpop.f32.mrf.mxu0
    %v679 = vadd.f32 0.0, %v678
    %680 = vdwg.mxu0
    %681 = vmatpush.bf16.msra.mxu0 %v618
    %682 = vmatpush.bf16.msra.mxu0 %v617
    %683 = vmatpush.bf16.msra.mxu0 %v616
    %684 = vmatpush.bf16.msra.mxu0 %v615
    %685 = vmatpush.bf16.msra.mxu0 %v614
    %686 = vmatpush.bf16.msra.mxu0 %v613
    %687 = vmatpush.bf16.msra.mxu0 %v612
    %688 = vmatpush.bf16.msra.mxu0 %v611
    %689 = vmatmul.bf16.gmra.mxu0 %v408
    %v690 = vpop.f32.mrf.mxu0
    %v691 = vadd.f32 %v677, %v690
    %v692 = vpop.f32.mrf.mxu0
    %v693 = vadd.f32 %v679, %v692
    %694 = vdwg.mxu0
    %695 = vmatpush.bf16.msra.mxu0 %v626
    %696 = vmatpush.bf16.msra.mxu0 %v625
    %697 = vmatpush.bf16.msra.mxu0 %v624
    %698 = vmatpush.bf16.msra.mxu0 %v623
    %699 = vmatpush.bf16.msra.mxu0 %v622
    %700 = vmatpush.bf16.msra.mxu0 %v621
    %701 = vmatpush.bf16.msra.mxu0 %v620
    %702 = vmatpush.bf16.msra.mxu0 %v619
    %703 = vmatmul.bf16.gmra.mxu0 %v409
    %v704 = vpop.f32.mrf.mxu0
    %v705 = vadd.f32 %v691, %v704
    %v706 = vpop.f32.mrf.mxu0
    %v707 = vadd.f32 %v693, %v706
    %708 = vdwg.mxu0
    %709 = vmatpush.bf16.msra.mxu0 %v634
    %710 = vmatpush.bf16.msra.mxu0 %v633
    %711 = vmatpush.bf16.msra.mxu0 %v632
    %712 = vmatpush.bf16.msra.mxu0 %v631
    %713 = vmatpush.bf16.msra.mxu0 %v630
    %714 = vmatpush.bf16.msra.mxu0 %v629
    %715 = vmatpush.bf16.msra.mxu0 %v628
    %716 = vmatpush.bf16.msra.mxu0 %v627
    %717 = vmatmul.bf16.gmra.mxu0 %v410
    %v718 = vpop.f32.mrf.mxu0
    %v719 = vadd.f32 %v705, %v718
    %v720 = vpop.f32.mrf.mxu0
    %v721 = vadd.f32 %v707, %v720
    %722 = vdwg.mxu0
    %v723 = vadd.f32 %v405, %v719
    %v724 = vadd.f32 %v406, %v721
    %725 = vst [vmem:[#allocation2] sm:$0xff] %v723
    %726 = vst [vmem:[#allocation2 + $0x8] sm:$0xff] %v724
    // Predicated region
    $region46: #{model_classifier_forward.12} parent=1 // pred_check
      %p727 = pneg %p61
    $region47: #{model_classifier_forward.12} parent=1 // pred_check_branch
      %729 = sbr.rel (%p727) target = $region49
    $region48: #{model_classifier_forward.12} parent=1 // pred_region
      %v730 = vld [vmem:[#allocation2] sm:$0xff]
      %v731 = vld [vmem:[#allocation2 + $0x8] sm:$0xff]
      %v732 = vld [vmem:[%s4] sm:$0x1]
      %v734 = vperm.slane %v732, 0
      %v736 = vadd.f32 %v730, %v734
      %v737 = vadd.f32 %v731, %v734
      %v738 = vld [vmem:[%s5] sm:$0xf]
      %v739 = vld [vmem:[%s5 + $0x4] sm:$0xf]
      %v740 = vunpack.c.l.bf16 %v738
      %v741 = vunpack.c.l.bf16 %v739
      %v742 = vadd.f32 %v736, %v740
      %v743 = vadd.f32 %v737, %v741
      %744 = vadd.xlane.f32.xlu0 %v742
      %v745 = vpop.xlane.xlu0 %744
      %746 = vadd.xlane.f32.xlu0 %v743
      %v747 = vpop.xlane.xlu0 %746
      %v748 = vrcp.pop 128.0
      %v749 = vmul.f32 128.0, %v748
      %v750 = vsub.f32 1.0, %v749
      %v751 = vmul.f32 %v748, %v750
      %v752 = vadd.f32 %v748, %v751
      %vm753 = vweird.f32 %v748
      %v754 = vsel %vm753, %v748, %v752
      %v755 = vmul.f32 %v745, %v754
      %v756 = vmul.f32 %v747, %v754
      %v757 = vsub.f32 %v742, %v755
      %v758 = vsub.f32 %v743, %v756
      %v759 = vmul.f32 %v757, %v757
      %v760 = vmul.f32 %v758, %v758
      %761 = vadd.xlane.f32.xlu0 %v759
      %v762 = vpop.xlane.xlu0 %761
      %763 = vadd.xlane.f32.xlu0 %v760
      %v764 = vpop.xlane.xlu0 %763
      %v765 = vmul.f32 %v762, %v754
      %v766 = vmul.f32 %v764, %v754
      %v767 = vadd.f32 %v765, 1e-12
      %v768 = vadd.f32 %v766, 1e-12
      %v769 = vrsqrt.pop %v767
      %v770 = vmul.f32 %v769, %v767
      %v771 = vmul.f32 %v770, %v769
      %v772 = vmul.f32 0.5, %v771
      %v773 = vsub.f32 1.5, %v772
      %v774 = vmul.f32 %v769, %v773
      %vm775 = vweird.f32 %v767
      %vm776 = vweird.f32 %v769
      %vm777 = vmor %vm775, %vm776
      %v778 = vsel %vm777, %v769, %v774
      %v779 = vrsqrt.pop %v768
      %v780 = vmul.f32 %v779, %v768
      %v781 = vmul.f32 %v780, %v779
      %v782 = vmul.f32 0.5, %v781
      %v783 = vsub.f32 1.5, %v782
      %v784 = vmul.f32 %v779, %v783
      %vm785 = vweird.f32 %v768
      %vm786 = vweird.f32 %v779
      %vm787 = vmor %vm785, %vm786
      %v788 = vsel %vm787, %v779, %v784
      %v789 = vmul.f32 %v757, %v778
      %v790 = vmul.f32 %v758, %v788
      %v791 = vld [vmem:[%s6] sm:$0x1]
      %v793 = vperm.slane %v791, 0
      %v795 = vmul.f32 %v789, %v793
      %v796 = vmul.f32 %v790, %v793
      %v797 = vld [vmem:[%s7] sm:$0x1]
      %v799 = vperm.slane %v797, 0
      %v801 = vadd.f32 %v795, %v799
      %v802 = vadd.f32 %v796, %v799
      %v803 = vpack.c.bf16 %v801, %v801
      %v804 = vpack.c.bf16 %v802, %v802
      %805 = vst [vmem:[%s8] sm:$0xf] %v803
      %806 = vst [vmem:[%s8 + $0x4] sm:$0xf] %v804
    $region49: #{model_classifier_forward.12} parent=1 // pred_fallthru
      _
    // Predicated region
    $region50: #{model_classifier_forward.12} parent=1 // pred_check
      _
    $region51: #{model_classifier_forward.12} parent=1 // pred_check_branch
      %808 = sbr.rel (0) target = $region53
    $region52: #{model_classifier_forward.12} parent=1 // pred_region
      _
    $region53: #{model_classifier_forward.12} parent=1 // pred_fallthru
      _
    // Predicated region
    $region54: #{model_classifier_forward.12} parent=1 // pred_check
      _
    $region55: #{model_classifier_forward.12} parent=1 // pred_check_branch
      %810 = sbr.rel (0) target = $region57
    $region56: #{model_classifier_forward.12} parent=1 // pred_region
      _
    $region57: #{model_classifier_forward.12} parent=1 // pred_fallthru
      _
    %811 = vsyncpa [#allocation4], 1
    %812 = vsyncpa [#allocation6], 1

// kernel: model_classifier_forward.17
$region0: #{model_classifier_forward.17}
  #allocation0 [shape = 'u32[]', space=smem, size = 0x4, offset = 0x4, fixed_abs, tag = 'smem constant byte address 0x4 - core index']
  #allocation1 [shape = 'u32[72,128]{1,0:T(1,128)}', space=vmem, size = 0x9000, scoped, tag = 'internal scratch']
  %s0 = inlined_call_operand.vmem [shape: bf16[8,128], index: 0, kind: input, shape index: {}]
  %s1 = inlined_call_operand.hbm [shape: bf16[128,128], index: 1, kind: input, shape index: {}]
  %s2 = inlined_call_operand.vmem [shape: f32[1,128], index: 2, kind: input, shape index: {}]
  %s3 = inlined_call_operand.hbm [shape: bf16[128,128], index: 3, kind: input, shape index: {}]
  %s4 = inlined_call_operand.vmem [shape: f32[1,128], index: 4, kind: input, shape index: {}]
  %s5 = inlined_call_operand.vmem [shape: f32[8,128], index: 5, kind: output, shape index: {}]
  %s6 = sld [smem:[#allocation0]]
  $region38: #{model_classifier_forward.17} parent=0
    _
  %s8 = ssub.s32 1, %s6
  %s9 = scalar_select 0, %s8, %s6
  $region1: #{model_classifier_forward.17} parent=0
    #allocation2 [shape = 'u8[32768]{0}', space=vmem, size = 0x8000, scoped, tag = 'input window, operand 1, single buffered']
    #allocation3 [shape = 's32[1]{0}', space=sflag, size = 0x4, scoped, tag = 'scoped memory for model_classifier_forward.17']
    #allocation4 [shape = 'u8[32768]{0}', space=vmem, size = 0x8000, scoped, tag = 'input window, operand 3, single buffered']
    #allocation5 [shape = 's32[1]{0}', space=sflag, size = 0x4, scoped, tag = 'scoped memory for model_classifier_forward.17']
    %10 = vsyncpa [#allocation3], 0
    %11 = vsyncpa [#allocation5], 0
    // Predicated region
    $region2: #{model_classifier_forward.17} parent=1 // pred_check
      _
    $region3: #{model_classifier_forward.17} parent=1 // pred_check_branch
      %13 = sbr.rel (0) target = $region5
    $region4: #{model_classifier_forward.17} parent=1 // pred_region
      _
    $region5: #{model_classifier_forward.17} parent=1 // pred_fallthru
      _
    // Predicated region
    $region6: #{model_classifier_forward.17} parent=1 // pred_check
      _
    $region7: #{model_classifier_forward.17} parent=1 // pred_check_branch
      %15 = sbr.rel (0) target = $region9
    $region8: #{model_classifier_forward.17} parent=1 // pred_region
      %17 = vsyncadd [#allocation3], 0
      %s18 = sshll.u32 %s1, 4
      %s19 = int_to_ptr.hbm [resolvable:$true] %s18
      %s20 = sshll.u32 [#allocation2], 4
      %s21 = int_to_ptr.vmem [resolvable:$true] %s20
      %26 = dma.hbm_to_vmem [thread:$0]  %s19, 1024, %s21, [#allocation3], 64, 64, 4
    $region9: #{model_classifier_forward.17} parent=1 // pred_fallthru
      _
    // Predicated region
    $region10: #{model_classifier_forward.17} parent=1 // pred_check
      _
    $region11: #{model_classifier_forward.17} parent=1 // pred_check_branch
      %28 = sbr.rel (0) target = $region13
    $region12: #{model_classifier_forward.17} parent=1 // pred_region
      _
    $region13: #{model_classifier_forward.17} parent=1 // pred_fallthru
      _
    // Predicated region
    $region14: #{model_classifier_forward.17} parent=1 // pred_check
      _
    $region15: #{model_classifier_forward.17} parent=1 // pred_check_branch
      %30 = sbr.rel (0) target = $region17
    $region16: #{model_classifier_forward.17} parent=1 // pred_region
      %32 = vsyncadd [#allocation5], 0
      %s33 = sshll.u32 %s3, 4
      %s34 = int_to_ptr.hbm [resolvable:$true] %s33
      %s35 = sshll.u32 [#allocation4], 4
      %s36 = int_to_ptr.vmem [resolvable:$true] %s35
      %41 = dma.hbm_to_vmem [thread:$0]  %s34, 1024, %s36, [#allocation5], 64, 64, 4
    $region17: #{model_classifier_forward.17} parent=1 // pred_fallthru
      _
    // Predicated region
    $region18: #{model_classifier_forward.17} parent=1 // pred_check
      _
    $region19: #{model_classifier_forward.17} parent=1 // pred_check_branch
      %43 = sbr.rel (0) target = $region21
    $region20: #{model_classifier_forward.17} parent=1 // pred_region
      _
    $region21: #{model_classifier_forward.17} parent=1 // pred_fallthru
      _
    // Predicated region
    $region22: #{model_classifier_forward.17} parent=1 // pred_check
      _
    $region23: #{model_classifier_forward.17} parent=1 // pred_check_branch
      %45 = sbr.rel (0) target = $region25
    $region24: #{model_classifier_forward.17} parent=1 // pred_region
      %47 = dma.done [#allocation3], 1024
    $region25: #{model_classifier_forward.17} parent=1 // pred_fallthru
      _
    // Predicated region
    $region26: #{model_classifier_forward.17} parent=1 // pred_check
      _
    $region27: #{model_classifier_forward.17} parent=1 // pred_check_branch
      %49 = sbr.rel (0) target = $region29
    $region28: #{model_classifier_forward.17} parent=1 // pred_region
      %51 = dma.done [#allocation5], 1024
    $region29: #{model_classifier_forward.17} parent=1 // pred_fallthru
      _
    %v52 = vld [vmem:[%s0] sm:$0xf]
    %v53 = vld [vmem:[#allocation2] sm:$0xf]
    %v54 = vld [vmem:[#allocation2 + $0x4] sm:$0xf]
    %v55 = vld [vmem:[#allocation2 + $0x8] sm:$0xf]
    %v56 = vld [vmem:[#allocation2 + $0xc] sm:$0xf]
    %v57 = vld [vmem:[#allocation2 + $0x10] sm:$0xf]
    %v58 = vld [vmem:[#allocation2 + $0x14] sm:$0xf]
    %v59 = vld [vmem:[#allocation2 + $0x18] sm:$0xf]
    %v60 = vld [vmem:[#allocation2 + $0x1c] sm:$0xf]
    %v61 = vld [vmem:[#allocation2 + $0x20] sm:$0xf]
    %v62 = vld [vmem:[#allocation2 + $0x24] sm:$0xf]
    %v63 = vld [vmem:[#allocation2 + $0x28] sm:$0xf]
    %v64 = vld [vmem:[#allocation2 + $0x2c] sm:$0xf]
    %v65 = vld [vmem:[#allocation2 + $0x30] sm:$0xf]
    %v66 = vld [vmem:[#allocation2 + $0x34] sm:$0xf]
    %v67 = vld [vmem:[#allocation2 + $0x38] sm:$0xf]
    %v68 = vld [vmem:[#allocation2 + $0x3c] sm:$0xf]
    %v69 = vld [vmem:[%s2] sm:$0x1]
    %v71 = vperm.slane %v69, 0
    %v89 = vunpack.c.l.b16 %v53
    %v90 = vunpack.c.l.b16 %v54
    %v91 = vunpack.c.l.b16 %v55
    %v92 = vunpack.c.l.b16 %v56
    %v93 = vunpack.c.l.b16 %v57
    %v94 = vunpack.c.l.b16 %v58
    %v95 = vunpack.c.l.b16 %v59
    %v96 = vunpack.c.l.b16 %v60
    %v97 = vunpack.c.l.b16 %v61
    %v98 = vunpack.c.l.b16 %v62
    %v99 = vunpack.c.l.b16 %v63
    %v100 = vunpack.c.l.b16 %v64
    %v101 = vunpack.c.l.b16 %v65
    %v102 = vunpack.c.l.b16 %v66
    %v103 = vunpack.c.l.b16 %v67
    %v104 = vunpack.c.l.b16 %v68
    %v105 = vpack.c.b16 %v90, %v89
    %v106 = vpack.c.b16 %v92, %v91
    %v107 = vpack.c.b16 %v94, %v93
    %v108 = vpack.c.b16 %v96, %v95
    %v109 = vpack.c.b16 %v98, %v97
    %v110 = vpack.c.b16 %v100, %v99
    %v111 = vpack.c.b16 %v102, %v101
    %v112 = vpack.c.b16 %v104, %v103
    %121 = vmatpush.bf16.msra.mxu0 %v112
    %122 = vmatpush.bf16.msra.mxu0 %v111
    %123 = vmatpush.bf16.msra.mxu0 %v110
    %124 = vmatpush.bf16.msra.mxu0 %v109
    %125 = vmatpush.bf16.msra.mxu0 %v108
    %126 = vmatpush.bf16.msra.mxu0 %v107
    %127 = vmatpush.bf16.msra.mxu0 %v106
    %128 = vmatpush.bf16.msra.mxu0 %v105
    %129 = vmatmul.bf16.gmra.mxu0 %v52
    %v130 = vpop.f32.mrf.mxu0
    %v131 = vadd.f32 %v71, %v130
    %v132 = vpop.f32.mrf.mxu0
    %133 = vdwg.mxu0
    %v134 = vmax.f32 %v131, 0.0
    %v135 = vpack.c.bf16 %v134, %v134
    %v136 = vld [vmem:[#allocation4] sm:$0xf]
    %v137 = vld [vmem:[#allocation4 + $0x4] sm:$0xf]
    %v138 = vld [vmem:[#allocation4 + $0x8] sm:$0xf]
    %v139 = vld [vmem:[#allocation4 + $0xc] sm:$0xf]
    %v140 = vld [vmem:[#allocation4 + $0x10] sm:$0xf]
    %v141 = vld [vmem:[#allocation4 + $0x14] sm:$0xf]
    %v142 = vld [vmem:[#allocation4 + $0x18] sm:$0xf]
    %v143 = vld [vmem:[#allocation4 + $0x1c] sm:$0xf]
    %v144 = vld [vmem:[#allocation4 + $0x20] sm:$0xf]
    %v145 = vld [vmem:[#allocation4 + $0x24] sm:$0xf]
    %v146 = vld [vmem:[#allocation4 + $0x28] sm:$0xf]
    %v147 = vld [vmem:[#allocation4 + $0x2c] sm:$0xf]
    %v148 = vld [vmem:[#allocation4 + $0x30] sm:$0xf]
    %v149 = vld [vmem:[#allocation4 + $0x34] sm:$0xf]
    %v150 = vld [vmem:[#allocation4 + $0x38] sm:$0xf]
    %v151 = vld [vmem:[#allocation4 + $0x3c] sm:$0xf]
    %v152 = vld [vmem:[%s4] sm:$0x1]
    %v154 = vperm.slane %v152, 0
    %v172 = vunpack.c.l.b16 %v136
    %v173 = vunpack.c.l.b16 %v137
    %v174 = vunpack.c.l.b16 %v138
    %v175 = vunpack.c.l.b16 %v139
    %v176 = vunpack.c.l.b16 %v140
    %v177 = vunpack.c.l.b16 %v141
    %v178 = vunpack.c.l.b16 %v142
    %v179 = vunpack.c.l.b16 %v143
    %v180 = vunpack.c.l.b16 %v144
    %v181 = vunpack.c.l.b16 %v145
    %v182 = vunpack.c.l.b16 %v146
    %v183 = vunpack.c.l.b16 %v147
    %v184 = vunpack.c.l.b16 %v148
    %v185 = vunpack.c.l.b16 %v149
    %v186 = vunpack.c.l.b16 %v150
    %v187 = vunpack.c.l.b16 %v151
    %v188 = vpack.c.b16 %v173, %v172
    %v189 = vpack.c.b16 %v175, %v174
    %v190 = vpack.c.b16 %v177, %v176
    %v191 = vpack.c.b16 %v179, %v178
    %v192 = vpack.c.b16 %v181, %v180
    %v193 = vpack.c.b16 %v183, %v182
    %v194 = vpack.c.b16 %v185, %v184
    %v195 = vpack.c.b16 %v187, %v186
    %204 = vmatpush.bf16.msra.mxu0 %v195
    %205 = vmatpush.bf16.msra.mxu0 %v194
    %206 = vmatpush.bf16.msra.mxu0 %v193
    %207 = vmatpush.bf16.msra.mxu0 %v192
    %208 = vmatpush.bf16.msra.mxu0 %v191
    %209 = vmatpush.bf16.msra.mxu0 %v190
    %210 = vmatpush.bf16.msra.mxu0 %v189
    %211 = vmatpush.bf16.msra.mxu0 %v188
    %212 = vmatmul.bf16.gmra.mxu0 %v135
    %v213 = vpop.f32.mrf.mxu0
    %v214 = vadd.f32 %v154, %v213
    %v215 = vpop.f32.mrf.mxu0
    %216 = vdwg.mxu0
    %217 = vst [vmem:[%s5] sm:$0xff] %v214
    // Predicated region
    $region30: #{model_classifier_forward.17} parent=1 // pred_check
      _
    $region31: #{model_classifier_forward.17} parent=1 // pred_check_branch
      %219 = sbr.rel (0) target = $region33
    $region32: #{model_classifier_forward.17} parent=1 // pred_region
      _
    $region33: #{model_classifier_forward.17} parent=1 // pred_fallthru
      _
    // Predicated region
    $region34: #{model_classifier_forward.17} parent=1 // pred_check
      _
    $region35: #{model_classifier_forward.17} parent=1 // pred_check_branch
      %221 = sbr.rel (0) target = $region37
    $region36: #{model_classifier_forward.17} parent=1 // pred_region
      _
    $region37: #{model_classifier_forward.17} parent=1 // pred_fallthru
      _
    %222 = vsyncpa [#allocation3], 1
    %223 = vsyncpa [#allocation5], 1

</llo_original>
